<compile_context>
chip_gen: v7x
topology: tpu7x:2x2x1
jax: 0.10.0
libtpu: 0.0.40
codegen_flags: <defaults>
</compile_context>

<pallas_src>
import functools

import jax
import jax.numpy as jnp
from jax.experimental import pallas as pl
from jax.experimental.pallas import tpu as pltpu

NEG_SLOPE = 0.01          # nn.LeakyReLU default
LATENT = 20
LATENT_PAD = 128          # latent axis padded to one full lane group
HIDDEN = 256


def _leaky_relu(v):
    return jnp.where(v >= 0, v, NEG_SLOPE * v)


def _round_up(x, m):
    return (x + m - 1) // m * m


def vae_kernel(
    x_ref, eps_ref,
    w1_ref, b1_ref, w2_ref, b2_ref,
    wml_ref, bml_ref,
    wd1_ref, bd1_ref, wd2_ref, bd2_ref, wd3_ref, bd3_ref,
    recon_ref, mulv_ref,
):
    x = x_ref[...]                                            # (TILE_N, D) f32

    # ---- encoder (bf16 MXU operands, f32 accumulate / elementwise) ----
    h = jnp.dot(x.astype(jnp.bfloat16), w1_ref[...],
                preferred_element_type=jnp.float32) + b1_ref[...]
    h = _leaky_relu(h)
    h = jnp.dot(h.astype(jnp.bfloat16), w2_ref[...],
                preferred_element_type=jnp.float32) + b2_ref[...]
    h = _leaky_relu(h)

    # ---- fused mu|logvar projection: (TILE_N, 2*LATENT_PAD) ----
    mulv = jnp.dot(h.astype(jnp.bfloat16), wml_ref[...],
                   preferred_element_type=jnp.float32) + bml_ref[...]
    mu = mulv[:, :LATENT_PAD]                                 # lane-aligned split
    logvar = mulv[:, LATENT_PAD:]

    # ---- reparameterize: z = mu + eps * exp(0.5 * logvar) ----
    std = jnp.exp(0.5 * logvar)
    z = mu + eps_ref[...] * std                               # (TILE_N, 128) f32

    # ---- decoder ----
    d = jnp.dot(z.astype(jnp.bfloat16), wd1_ref[...],
                preferred_element_type=jnp.float32) + bd1_ref[...]
    d = _leaky_relu(d)
    d = jnp.dot(d.astype(jnp.bfloat16), wd2_ref[...],
                preferred_element_type=jnp.float32) + bd2_ref[...]
    d = _leaky_relu(d)
    logits = jnp.dot(d.astype(jnp.bfloat16), wd3_ref[...],
                     preferred_element_type=jnp.float32) + bd3_ref[...]

    recon_ref[...] = jax.nn.sigmoid(logits)
    mulv_ref[...] = mulv                                      # lane-dense store


@jax.jit
def lnn_vae_forward(x_nchw, eps, params):
    """x_nchw: (N, C, H, W) f32. eps: (N, LATENT) f32 reparam noise.

    Returns (recon (N, D), mu (N, LATENT), logvar (N, LATENT))."""
    n = x_nchw.shape[0]
    d = x_nchw.shape[1] * x_nchw.shape[2] * x_nchw.shape[3]
    x_flat = x_nchw.reshape(n, d)                             # torch .view(N, -1)

    (w1, b1, w2, b2, wmu, bmu, wlv, blv, wd1, bd1, wd2, bd2, wd3, bd3) = params

    # ---- batch tiling: pad N to a sublane/MXU-friendly multiple ----
    tile_n = 256 if n >= 256 else max(8, _round_up(n, 8))
    n_pad = _round_up(n, tile_n)
    grid = (n_pad // tile_n,)

    x_p = jnp.pad(x_flat, ((0, n_pad - n), (0, 0)))
    eps_p = jnp.pad(eps, ((0, n_pad - n), (0, LATENT_PAD - LATENT)))

    # ---- pack / pad weights, cast matmul operands to bf16 ----
    def pad_cols(w, width):
        return jnp.pad(w, ((0, 0), (0, width - w.shape[1])))

    wmu_p = pad_cols(wmu, LATENT_PAD)                         # (HIDDEN, 128)
    wlv_p = pad_cols(wlv, LATENT_PAD)
    wml = jnp.concatenate([wmu_p, wlv_p], axis=1)             # (HIDDEN, 256)
    bml = jnp.concatenate([jnp.pad(bmu, (0, LATENT_PAD - LATENT)),
                           jnp.pad(blv, (0, LATENT_PAD - LATENT))])  # (256,)
    wd1_p = jnp.pad(wd1, ((0, LATENT_PAD - LATENT), (0, 0)))  # (128, HIDDEN)

    bf16 = jnp.bfloat16
    operands = (
        x_p, eps_p,
        w1.astype(bf16), b1.reshape(1, -1),
        w2.astype(bf16), b2.reshape(1, -1),
        wml.astype(bf16), bml.reshape(1, -1),
        wd1_p.astype(bf16), bd1.reshape(1, -1),
        wd2.astype(bf16), bd2.reshape(1, -1),
        wd3.astype(bf16), bd3.reshape(1, -1),
    )

    def batch_spec(cols):
        return pl.BlockSpec((tile_n, cols), lambda i: (i, 0))

    def resident_spec(arr):
        return pl.BlockSpec(arr.shape, lambda i: (0, 0))

    in_specs = [batch_spec(d), batch_spec(LATENT_PAD)]
    in_specs += [resident_spec(op) for op in operands[2:]]

    recon_p, mulv_p = pl.pallas_call(
        vae_kernel,
        out_shape=(
            jax.ShapeDtypeStruct((n_pad, d), jnp.float32),
            jax.ShapeDtypeStruct((n_pad, 2 * LATENT_PAD), jnp.float32),
        ),
        grid=grid,
        in_specs=in_specs,
        out_specs=(batch_spec(d), batch_spec(2 * LATENT_PAD)),
        compiler_params=pltpu.CompilerParams(
            dimension_semantics=("parallel",),
            vmem_limit_bytes=64 * 1024 * 1024,
        ),
    )(*operands)

    recon = recon_p[:n, :]
    mu = mulv_p[:n, :LATENT]
    logvar = mulv_p[:n, LATENT_PAD:LATENT_PAD + LATENT]
    return recon, mu, logvar


def init_params(key, input_channels, image_size):
    """Deterministic synthetic init mirroring the nn.Linear shapes.

    Weights are stored as (in_features, out_features)."""
    d = input_channels * image_size ** 2
    dims = [
        (d, HIDDEN),        # encoder linear 1
        (HIDDEN, HIDDEN),   # encoder linear 2
        (HIDDEN, LATENT),   # mu_proj
        (HIDDEN, LATENT),   # logvar_proj
        (LATENT, HIDDEN),   # decoder linear 1
        (HIDDEN, HIDDEN),   # decoder linear 2
        (HIDDEN, d),        # decoder linear 3
    ]
    params = []
    for fan_in, fan_out in dims:
        key, kw, kb = jax.random.split(key, 3)
        bound = 1.0 / jnp.sqrt(fan_in)
        w = jax.random.uniform(kw, (fan_in, fan_out), jnp.float32, -bound, bound)
        b = jax.random.uniform(kb, (fan_out,), jnp.float32, -bound, bound)
        params.append(w)
        params.append(b)
    return tuple(params)


if __name__ == "__main__":
    # Small but consistent shapes: batch=2, channels=3, spatial=16 -> D=768.
    batch, channels, image_size = 2, 3, 16

    root = jax.random.PRNGKey(0)
    k_x, k_eps, k_p = jax.random.split(root, 3)

    x = jax.random.normal(k_x, (batch, channels, image_size, image_size), jnp.float32)
    # torch.randn_like(std) inside forward -> supplied externally for determinism.
    eps = jax.random.normal(k_eps, (batch, LATENT), jnp.float32)
    params = init_params(k_p, channels, image_size)

    recon, mu, logvar = lnn_vae_forward(x, eps, params)
    jax.block_until_ready((recon, mu, logvar))

    assert recon.shape == (batch, channels * image_size ** 2)
    assert mu.shape == (batch, LATENT) and logvar.shape == (batch, LATENT)
    assert bool(jnp.all(jnp.isfinite(recon)))
    assert bool(jnp.all((recon >= 0) & (recon <= 1)))
    print("KERNEL_OK")
</pallas_src>

<mosaic_0001>
module attributes {stable_mosaic.version = 11 : i64} {
  func.func @vae_kernel(%arg0: i32, %arg1: memref<8x768xf32, #tpu.memory_space<vmem>>, %arg2: memref<8x128xf32, #tpu.memory_space<vmem>>, %arg3: memref<768x256xbf16, #tpu.memory_space<vmem>>, %arg4: memref<1x256xf32, #tpu.memory_space<vmem>>, %arg5: memref<256x256xbf16, #tpu.memory_space<vmem>>, %arg6: memref<1x256xf32, #tpu.memory_space<vmem>>, %arg7: memref<256x256xbf16, #tpu.memory_space<vmem>>, %arg8: memref<1x256xf32, #tpu.memory_space<vmem>>, %arg9: memref<128x256xbf16, #tpu.memory_space<vmem>>, %arg10: memref<1x256xf32, #tpu.memory_space<vmem>>, %arg11: memref<256x256xbf16, #tpu.memory_space<vmem>>, %arg12: memref<1x256xf32, #tpu.memory_space<vmem>>, %arg13: memref<256x768xbf16, #tpu.memory_space<vmem>>, %arg14: memref<1x768xf32, #tpu.memory_space<vmem>>, %arg15: memref<8x768xf32, #tpu.memory_space<vmem>>, %arg16: memref<8x256xf32, #tpu.memory_space<vmem>>) attributes {dimension_semantics = [#tpu.dimension_semantics<parallel>], iteration_bounds = array<i64: 1>, scalar_prefetch = 0 : i64, scratch_operands = 0 : i64, tpu.core_type = #tpu.core_type<tc>, window_params = [{transform_indices = @transform_0, window_bounds = array<i64: 8, 768>}, {transform_indices = @transform_1, window_bounds = array<i64: 8, 128>}, {pipeline_mode = #tpu.pipeline_mode<synchronous>, transform_indices = @transform_2, window_bounds = array<i64: 768, 256>}, {pipeline_mode = #tpu.pipeline_mode<synchronous>, transform_indices = @transform_3, window_bounds = array<i64: 1, 256>}, {pipeline_mode = #tpu.pipeline_mode<synchronous>, transform_indices = @transform_4, window_bounds = array<i64: 256, 256>}, {pipeline_mode = #tpu.pipeline_mode<synchronous>, transform_indices = @transform_5, window_bounds = array<i64: 1, 256>}, {pipeline_mode = #tpu.pipeline_mode<synchronous>, transform_indices = @transform_6, window_bounds = array<i64: 256, 256>}, {pipeline_mode = #tpu.pipeline_mode<synchronous>, transform_indices = @transform_7, window_bounds = array<i64: 1, 256>}, {pipeline_mode = #tpu.pipeline_mode<synchronous>, transform_indices = @transform_8, window_bounds = array<i64: 128, 256>}, {pipeline_mode = #tpu.pipeline_mode<synchronous>, transform_indices = @transform_9, window_bounds = array<i64: 1, 256>}, {pipeline_mode = #tpu.pipeline_mode<synchronous>, transform_indices = @transform_10, window_bounds = array<i64: 256, 256>}, {pipeline_mode = #tpu.pipeline_mode<synchronous>, transform_indices = @transform_11, window_bounds = array<i64: 1, 256>}, {pipeline_mode = #tpu.pipeline_mode<synchronous>, transform_indices = @transform_12, window_bounds = array<i64: 256, 768>}, {pipeline_mode = #tpu.pipeline_mode<synchronous>, transform_indices = @transform_13, window_bounds = array<i64: 1, 768>}, {transform_indices = @transform_14, window_bounds = array<i64: 8, 768>}, {transform_indices = @transform_15, window_bounds = array<i64: 8, 256>}]} {
    %c0 = arith.constant 0 : index
    %c0_0 = arith.constant 0 : index
    %0 = vector.load %arg1[%c0, %c0_0] : memref<8x768xf32, #tpu.memory_space<vmem>>, vector<8x768xf32>
    %1 = arith.truncf %0 : vector<8x768xf32> to vector<8x768xbf16>
    %c0_1 = arith.constant 0 : index
    %c0_2 = arith.constant 0 : index
    %2 = vector.load %arg3[%c0_1, %c0_2] : memref<768x256xbf16, #tpu.memory_space<vmem>>, vector<768x256xbf16>
    %cst = arith.constant dense<0.000000e+00> : vector<8x256xf32>
    %3 = tpu.matmul %1, %2, %cst {dimension_numbers = #tpu.dot_dimension_numbers<[1], [0], [0], [1], [0, 0, 1, 1], [], []>} : vector<8x768xbf16>, vector<768x256xbf16>, vector<8x256xf32> -> vector<8x256xf32>
    %c0_3 = arith.constant 0 : index
    %c0_4 = arith.constant 0 : index
    %4 = vector.load %arg4[%c0_3, %c0_4] : memref<1x256xf32, #tpu.memory_space<vmem>>, vector<1x256xf32>
    %5 = vector.broadcast %4 : vector<1x256xf32> to vector<8x256xf32>
    %6 = arith.addf %3, %5 : vector<8x256xf32>
    %cst_5 = arith.constant 0.000000e+00 : f32
    %7 = vector.broadcast %cst_5 : f32 to vector<8x256xf32>
    %8 = arith.cmpf oge, %6, %7 : vector<8x256xf32>
    %cst_6 = arith.constant 0.00999999977 : f32
    %9 = vector.broadcast %cst_6 : f32 to vector<8x256xf32>
    %10 = arith.mulf %9, %6 : vector<8x256xf32>
    %11 = arith.select %8, %6, %10 : vector<8x256xi1>, vector<8x256xf32>
    %12 = arith.truncf %11 : vector<8x256xf32> to vector<8x256xbf16>
    %c0_7 = arith.constant 0 : index
    %c0_8 = arith.constant 0 : index
    %13 = vector.load %arg5[%c0_7, %c0_8] : memref<256x256xbf16, #tpu.memory_space<vmem>>, vector<256x256xbf16>
    %cst_9 = arith.constant dense<0.000000e+00> : vector<8x256xf32>
    %14 = tpu.matmul %12, %13, %cst_9 {dimension_numbers = #tpu.dot_dimension_numbers<[1], [0], [0], [1], [0, 0, 1, 1], [], []>} : vector<8x256xbf16>, vector<256x256xbf16>, vector<8x256xf32> -> vector<8x256xf32>
    %c0_10 = arith.constant 0 : index
    %c0_11 = arith.constant 0 : index
    %15 = vector.load %arg6[%c0_10, %c0_11] : memref<1x256xf32, #tpu.memory_space<vmem>>, vector<1x256xf32>
    %16 = vector.broadcast %15 : vector<1x256xf32> to vector<8x256xf32>
    %17 = arith.addf %14, %16 : vector<8x256xf32>
    %cst_12 = arith.constant 0.000000e+00 : f32
    %18 = vector.broadcast %cst_12 : f32 to vector<8x256xf32>
    %19 = arith.cmpf oge, %17, %18 : vector<8x256xf32>
    %cst_13 = arith.constant 0.00999999977 : f32
    %20 = vector.broadcast %cst_13 : f32 to vector<8x256xf32>
    %21 = arith.mulf %20, %17 : vector<8x256xf32>
    %22 = arith.select %19, %17, %21 : vector<8x256xi1>, vector<8x256xf32>
    %23 = arith.truncf %22 : vector<8x256xf32> to vector<8x256xbf16>
    %c0_14 = arith.constant 0 : index
    %c0_15 = arith.constant 0 : index
    %24 = vector.load %arg7[%c0_14, %c0_15] : memref<256x256xbf16, #tpu.memory_space<vmem>>, vector<256x256xbf16>
    %cst_16 = arith.constant dense<0.000000e+00> : vector<8x256xf32>
    %25 = tpu.matmul %23, %24, %cst_16 {dimension_numbers = #tpu.dot_dimension_numbers<[1], [0], [0], [1], [0, 0, 1, 1], [], []>} : vector<8x256xbf16>, vector<256x256xbf16>, vector<8x256xf32> -> vector<8x256xf32>
    %c0_17 = arith.constant 0 : index
    %c0_18 = arith.constant 0 : index
    %26 = vector.load %arg8[%c0_17, %c0_18] : memref<1x256xf32, #tpu.memory_space<vmem>>, vector<1x256xf32>
    %27 = vector.broadcast %26 : vector<1x256xf32> to vector<8x256xf32>
    %28 = arith.addf %25, %27 : vector<8x256xf32>
    %29 = vector.extract_strided_slice %28 {offsets = [0, 0], sizes = [8, 128], strides = [1, 1]} : vector<8x256xf32> to vector<8x128xf32>
    %30 = vector.extract_strided_slice %28 {offsets = [0, 128], sizes = [8, 128], strides = [1, 1]} : vector<8x256xf32> to vector<8x128xf32>
    %cst_19 = arith.constant 5.000000e-01 : f32
    %31 = vector.broadcast %cst_19 : f32 to vector<8x128xf32>
    %32 = arith.mulf %31, %30 : vector<8x128xf32>
    %33 = math.exp %32 : vector<8x128xf32>
    %c0_20 = arith.constant 0 : index
    %c0_21 = arith.constant 0 : index
    %34 = vector.load %arg2[%c0_20, %c0_21] : memref<8x128xf32, #tpu.memory_space<vmem>>, vector<8x128xf32>
    %35 = arith.mulf %34, %33 : vector<8x128xf32>
    %36 = arith.addf %29, %35 : vector<8x128xf32>
    %37 = arith.truncf %36 : vector<8x128xf32> to vector<8x128xbf16>
    %c0_22 = arith.constant 0 : index
    %c0_23 = arith.constant 0 : index
    %38 = vector.load %arg9[%c0_22, %c0_23] : memref<128x256xbf16, #tpu.memory_space<vmem>>, vector<128x256xbf16>
    %cst_24 = arith.constant dense<0.000000e+00> : vector<8x256xf32>
    %39 = tpu.matmul %37, %38, %cst_24 {dimension_numbers = #tpu.dot_dimension_numbers<[1], [0], [0], [1], [0, 0, 1, 1], [], []>} : vector<8x128xbf16>, vector<128x256xbf16>, vector<8x256xf32> -> vector<8x256xf32>
    %c0_25 = arith.constant 0 : index
    %c0_26 = arith.constant 0 : index
    %40 = vector.load %arg10[%c0_25, %c0_26] : memref<1x256xf32, #tpu.memory_space<vmem>>, vector<1x256xf32>
    %41 = vector.broadcast %40 : vector<1x256xf32> to vector<8x256xf32>
    %42 = arith.addf %39, %41 : vector<8x256xf32>
    %cst_27 = arith.constant 0.000000e+00 : f32
    %43 = vector.broadcast %cst_27 : f32 to vector<8x256xf32>
    %44 = arith.cmpf oge, %42, %43 : vector<8x256xf32>
    %cst_28 = arith.constant 0.00999999977 : f32
    %45 = vector.broadcast %cst_28 : f32 to vector<8x256xf32>
    %46 = arith.mulf %45, %42 : vector<8x256xf32>
    %47 = arith.select %44, %42, %46 : vector<8x256xi1>, vector<8x256xf32>
    %48 = arith.truncf %47 : vector<8x256xf32> to vector<8x256xbf16>
    %c0_29 = arith.constant 0 : index
    %c0_30 = arith.constant 0 : index
    %49 = vector.load %arg11[%c0_29, %c0_30] : memref<256x256xbf16, #tpu.memory_space<vmem>>, vector<256x256xbf16>
    %cst_31 = arith.constant dense<0.000000e+00> : vector<8x256xf32>
    %50 = tpu.matmul %48, %49, %cst_31 {dimension_numbers = #tpu.dot_dimension_numbers<[1], [0], [0], [1], [0, 0, 1, 1], [], []>} : vector<8x256xbf16>, vector<256x256xbf16>, vector<8x256xf32> -> vector<8x256xf32>
    %c0_32 = arith.constant 0 : index
    %c0_33 = arith.constant 0 : index
    %51 = vector.load %arg12[%c0_32, %c0_33] : memref<1x256xf32, #tpu.memory_space<vmem>>, vector<1x256xf32>
    %52 = vector.broadcast %51 : vector<1x256xf32> to vector<8x256xf32>
    %53 = arith.addf %50, %52 : vector<8x256xf32>
    %cst_34 = arith.constant 0.000000e+00 : f32
    %54 = vector.broadcast %cst_34 : f32 to vector<8x256xf32>
    %55 = arith.cmpf oge, %53, %54 : vector<8x256xf32>
    %cst_35 = arith.constant 0.00999999977 : f32
    %56 = vector.broadcast %cst_35 : f32 to vector<8x256xf32>
    %57 = arith.mulf %56, %53 : vector<8x256xf32>
    %58 = arith.select %55, %53, %57 : vector<8x256xi1>, vector<8x256xf32>
    %59 = arith.truncf %58 : vector<8x256xf32> to vector<8x256xbf16>
    %c0_36 = arith.constant 0 : index
    %c0_37 = arith.constant 0 : index
    %60 = vector.load %arg13[%c0_36, %c0_37] : memref<256x768xbf16, #tpu.memory_space<vmem>>, vector<256x768xbf16>
    %cst_38 = arith.constant dense<0.000000e+00> : vector<8x768xf32>
    %61 = tpu.matmul %59, %60, %cst_38 {dimension_numbers = #tpu.dot_dimension_numbers<[1], [0], [0], [1], [0, 0, 1, 1], [], []>} : vector<8x256xbf16>, vector<256x768xbf16>, vector<8x768xf32> -> vector<8x768xf32>
    %c0_39 = arith.constant 0 : index
    %c0_40 = arith.constant 0 : index
    %62 = vector.load %arg14[%c0_39, %c0_40] : memref<1x768xf32, #tpu.memory_space<vmem>>, vector<1x768xf32>
    %63 = vector.broadcast %62 : vector<1x768xf32> to vector<8x768xf32>
    %64 = arith.addf %61, %63 : vector<8x768xf32>
    %65 = arith.negf %64 : vector<8x768xf32>
    %66 = math.exp %65 : vector<8x768xf32>
    %cst_41 = arith.constant 1.000000e+00 : f32
    %67 = vector.broadcast %cst_41 : f32 to vector<8x768xf32>
    %68 = arith.addf %67, %66 : vector<8x768xf32>
    %69 = arith.divf %67, %68 : vector<8x768xf32>
    %c0_42 = arith.constant 0 : index
    %c0_43 = arith.constant 0 : index
    %70 = vector.load %arg15[%c0_42, %c0_43] : memref<8x768xf32, #tpu.memory_space<vmem>>, vector<8x768xf32>
    tpu.vector_store %arg15[%c0_42, %c0_43], %69 {strides = array<i32>} : memref<8x768xf32, #tpu.memory_space<vmem>>, vector<8x768xf32>,
    %c0_44 = arith.constant 0 : index
    %c0_45 = arith.constant 0 : index
    %71 = vector.load %arg16[%c0_44, %c0_45] : memref<8x256xf32, #tpu.memory_space<vmem>>, vector<8x256xf32>
    tpu.vector_store %arg16[%c0_44, %c0_45], %28 {strides = array<i32>} : memref<8x256xf32, #tpu.memory_space<vmem>>, vector<8x256xf32>,
    return
  }
  func.func @transform_0(%arg0: i32) -> (i32, i32) {
    %c0_i32 = arith.constant 0 : i32
    %c0_i32_0 = arith.constant 0 : i32
    return %arg0, %c0_i32 : i32, i32
  }
  func.func @transform_1(%arg0: i32) -> (i32, i32) {
    %c0_i32 = arith.constant 0 : i32
    %c0_i32_0 = arith.constant 0 : i32
    return %arg0, %c0_i32 : i32, i32
  }
  func.func @transform_2(%arg0: i32) -> (i32, i32) {
    %c0_i32 = arith.constant 0 : i32
    %c0_i32_0 = arith.constant 0 : i32
    %c0_i32_1 = arith.constant 0 : i32
    return %c0_i32, %c0_i32_0 : i32, i32
  }
  func.func @transform_3(%arg0: i32) -> (i32, i32) {
    %c0_i32 = arith.constant 0 : i32
    %c0_i32_0 = arith.constant 0 : i32
    %c0_i32_1 = arith.constant 0 : i32
    return %c0_i32, %c0_i32_0 : i32, i32
  }
  func.func @transform_4(%arg0: i32) -> (i32, i32) {
    %c0_i32 = arith.constant 0 : i32
    %c0_i32_0 = arith.constant 0 : i32
    %c0_i32_1 = arith.constant 0 : i32
    return %c0_i32, %c0_i32_0 : i32, i32
  }
  func.func @transform_5(%arg0: i32) -> (i32, i32) {
    %c0_i32 = arith.constant 0 : i32
    %c0_i32_0 = arith.constant 0 : i32
    %c0_i32_1 = arith.constant 0 : i32
    return %c0_i32, %c0_i32_0 : i32, i32
  }
  func.func @transform_6(%arg0: i32) -> (i32, i32) {
    %c0_i32 = arith.constant 0 : i32
    %c0_i32_0 = arith.constant 0 : i32
    %c0_i32_1 = arith.constant 0 : i32
    return %c0_i32, %c0_i32_0 : i32, i32
  }
  func.func @transform_7(%arg0: i32) -> (i32, i32) {
    %c0_i32 = arith.constant 0 : i32
    %c0_i32_0 = arith.constant 0 : i32
    %c0_i32_1 = arith.constant 0 : i32
    return %c0_i32, %c0_i32_0 : i32, i32
  }
  func.func @transform_8(%arg0: i32) -> (i32, i32) {
    %c0_i32 = arith.constant 0 : i32
    %c0_i32_0 = arith.constant 0 : i32
    %c0_i32_1 = arith.constant 0 : i32
    return %c0_i32, %c0_i32_0 : i32, i32
  }
  func.func @transform_9(%arg0: i32) -> (i32, i32) {
    %c0_i32 = arith.constant 0 : i32
    %c0_i32_0 = arith.constant 0 : i32
    %c0_i32_1 = arith.constant 0 : i32
    return %c0_i32, %c0_i32_0 : i32, i32
  }
  func.func @transform_10(%arg0: i32) -> (i32, i32) {
    %c0_i32 = arith.constant 0 : i32
    %c0_i32_0 = arith.constant 0 : i32
    %c0_i32_1 = arith.constant 0 : i32
    return %c0_i32, %c0_i32_0 : i32, i32
  }
  func.func @transform_11(%arg0: i32) -> (i32, i32) {
    %c0_i32 = arith.constant 0 : i32
    %c0_i32_0 = arith.constant 0 : i32
    %c0_i32_1 = arith.constant 0 : i32
    return %c0_i32, %c0_i32_0 : i32, i32
  }
  func.func @transform_12(%arg0: i32) -> (i32, i32) {
    %c0_i32 = arith.constant 0 : i32
    %c0_i32_0 = arith.constant 0 : i32
    %c0_i32_1 = arith.constant 0 : i32
    return %c0_i32, %c0_i32_0 : i32, i32
  }
  func.func @transform_13(%arg0: i32) -> (i32, i32) {
    %c0_i32 = arith.constant 0 : i32
    %c0_i32_0 = arith.constant 0 : i32
    %c0_i32_1 = arith.constant 0 : i32
    return %c0_i32, %c0_i32_0 : i32, i32
  }
  func.func @transform_14(%arg0: i32) -> (i32, i32) {
    %c0_i32 = arith.constant 0 : i32
    %c0_i32_0 = arith.constant 0 : i32
    return %arg0, %c0_i32 : i32, i32
  }
  func.func @transform_15(%arg0: i32) -> (i32, i32) {
    %c0_i32 = arith.constant 0 : i32
    %c0_i32_0 = arith.constant 0 : i32
    return %arg0, %c0_i32 : i32, i32
  }
}

</mosaic_0001>

<llo_original>
// kernel: lnn_vae_forward.1
$region0: #{lnn_vae_forward.1}
  #allocation0 [shape = 'u32[]', space=smem, size = 0x4, offset = 0x4, fixed_abs, tag = 'smem constant byte address 0x4 - core index']
  #allocation1 [shape = 'u32[144,128]{1,0:T(1,128)}', space=vmem, size = 0x12000, scoped, tag = 'internal scratch']
  %s0 = inlined_call_operand.hbm [shape: f32[8,768], index: 0, kind: input, shape index: {}]
  %s1 = inlined_call_operand.hbm [shape: f32[8,128], index: 1, kind: input, shape index: {}]
  %s2 = inlined_call_operand.hbm [shape: bf16[768,256], index: 2, kind: input, shape index: {}]
  %s3 = inlined_call_operand.hbm [shape: f32[1,256], index: 3, kind: input, shape index: {}]
  %s4 = inlined_call_operand.hbm [shape: bf16[256,256], index: 4, kind: input, shape index: {}]
  %s5 = inlined_call_operand.hbm [shape: f32[1,256], index: 5, kind: input, shape index: {}]
  %s6 = inlined_call_operand.hbm [shape: bf16[256,256], index: 6, kind: input, shape index: {}]
  %s7 = inlined_call_operand.hbm [shape: f32[1,256], index: 7, kind: input, shape index: {}]
  %s8 = inlined_call_operand.hbm [shape: bf16[128,256], index: 8, kind: input, shape index: {}]
  %s9 = inlined_call_operand.hbm [shape: f32[1,256], index: 9, kind: input, shape index: {}]
  %s10 = inlined_call_operand.hbm [shape: bf16[256,256], index: 10, kind: input, shape index: {}]
  %s11 = inlined_call_operand.hbm [shape: f32[1,256], index: 11, kind: input, shape index: {}]
  %s12 = inlined_call_operand.hbm [shape: bf16[256,768], index: 12, kind: input, shape index: {}]
  %s13 = inlined_call_operand.hbm [shape: f32[1,768], index: 13, kind: input, shape index: {}]
  %s14 = inlined_call_operand.hbm [shape: f32[8,768], index: 14, kind: output, shape index: {0}]
  %s15 = inlined_call_operand.hbm [shape: f32[8,256], index: 15, kind: output, shape index: {1}]
  %16 = xla_tuple %s14, %s15
  %s17 = sld [smem:[#allocation0]]
  $region130: #{lnn_vae_forward.1} parent=0
    _
  %s19 = ssub.s32 1, %s17
  %s20 = scalar_select 0, %s19, %s17
  $region1: #{lnn_vae_forward.1} parent=0
    #allocation2 [shape = 'u8[24576]{0}', space=vmem, size = 0x6000, scoped, tag = 'input window, operand 0, single buffered']
    #allocation3 [shape = 's32[1]{0}', space=sflag, size = 0x4, scoped, tag = 'scoped memory for lnn_vae_forward.1']
    #allocation4 [shape = 's32[1]{0}', space=sflag, size = 0x4, scoped, tag = 'scoped memory for lnn_vae_forward.1']
    #allocation5 [shape = 'u8[4096]{0}', space=vmem, size = 0x1000, scoped, tag = 'input window, operand 1, single buffered']
    #allocation6 [shape = 's32[1]{0}', space=sflag, size = 0x4, scoped, tag = 'scoped memory for lnn_vae_forward.1']
    #allocation7 [shape = 'u8[393216]{0}', space=vmem, size = 0x60000, scoped, tag = 'input window, operand 2, single buffered']
    #allocation8 [shape = 'u8[1024]{0}', space=vmem, size = 0x400, scoped, tag = 'input window, operand 3, single buffered']
    #allocation9 [shape = 's32[1]{0}', space=sflag, size = 0x4, scoped, tag = 'scoped memory for lnn_vae_forward.1']
    #allocation10 [shape = 'u8[131072]{0}', space=vmem, size = 0x20000, scoped, tag = 'input window, operand 4, single buffered']
    #allocation11 [shape = 'u8[1024]{0}', space=vmem, size = 0x400, scoped, tag = 'input window, operand 5, single buffered']
    #allocation12 [shape = 's32[1]{0}', space=sflag, size = 0x4, scoped, tag = 'scoped memory for lnn_vae_forward.1']
    #allocation13 [shape = 'u8[131072]{0}', space=vmem, size = 0x20000, scoped, tag = 'input window, operand 6, single buffered']
    #allocation14 [shape = 'u8[1024]{0}', space=vmem, size = 0x400, scoped, tag = 'input window, operand 7, single buffered']
    #allocation15 [shape = 's32[1]{0}', space=sflag, size = 0x4, scoped, tag = 'scoped memory for lnn_vae_forward.1']
    #allocation16 [shape = 'u8[65536]{0}', space=vmem, size = 0x10000, scoped, tag = 'input window, operand 8, single buffered']
    #allocation17 [shape = 'u8[1024]{0}', space=vmem, size = 0x400, scoped, tag = 'input window, operand 9, single buffered']
    #allocation18 [shape = 's32[1]{0}', space=sflag, size = 0x4, scoped, tag = 'scoped memory for lnn_vae_forward.1']
    #allocation19 [shape = 'u8[131072]{0}', space=vmem, size = 0x20000, scoped, tag = 'input window, operand 10, single buffered']
    #allocation20 [shape = 'u8[1024]{0}', space=vmem, size = 0x400, scoped, tag = 'input window, operand 11, single buffered']
    #allocation21 [shape = 's32[1]{0}', space=sflag, size = 0x4, scoped, tag = 'scoped memory for lnn_vae_forward.1']
    #allocation22 [shape = 'u8[393216]{0}', space=vmem, size = 0x60000, scoped, tag = 'input window, operand 12, single buffered']
    #allocation23 [shape = 'u8[3072]{0}', space=vmem, size = 0xc00, scoped, tag = 'input window, operand 13, single buffered']
    #allocation24 [shape = 's32[1]{0}', space=sflag, size = 0x4, scoped, tag = 'scoped memory for lnn_vae_forward.1']
    #allocation25 [shape = 'u8[24576]{0}', space=vmem, size = 0x6000, scoped, tag = 'output window, operand 0, single buffered']
    #allocation26 [shape = 'u8[8192]{0}', space=vmem, size = 0x2000, scoped, tag = 'output window, operand 1, single buffered']
    #allocation27 [shape = 's32[1]{0}', space=sflag, size = 0x4, scoped, tag = 'scoped memory for lnn_vae_forward.1']
    %21 = vsyncpa [#allocation3], 0
    %22 = vsyncpa [#allocation6], 0
    %23 = vsyncpa [#allocation9], 0
    %24 = vsyncpa [#allocation12], 0
    %25 = vsyncpa [#allocation15], 0
    %26 = vsyncpa [#allocation18], 0
    %27 = vsyncpa [#allocation21], 0
    %28 = vsyncpa [#allocation24], 0
    %29 = vsyncpa [#allocation4], 0
    %30 = vsyncpa [#allocation27], 0
    // Predicated region
    $region2: #{lnn_vae_forward.1} parent=1 // pred_check
      _
    $region3: #{lnn_vae_forward.1} parent=1 // pred_check_branch
      %32 = sbr.rel (0) target = $region5
    $region4: #{lnn_vae_forward.1} parent=1 // pred_region
      %s34 = ssub.s32 768, 768
      %35 = vsyncadd [#allocation3], %s34
      %s37 = sshll.u32 [#allocation2], 4
      %s38 = int_to_ptr.vmem [resolvable:$true] %s37
      %40 = dma.hbm_to_vmem [thread:$0]  %s0, 768, %s38, [#allocation3]
    $region5: #{lnn_vae_forward.1} parent=1 // pred_fallthru
      _
    // Predicated region
    $region6: #{lnn_vae_forward.1} parent=1 // pred_check
      _
    $region7: #{lnn_vae_forward.1} parent=1 // pred_check_branch
      %42 = sbr.rel (0) target = $region9
    $region8: #{lnn_vae_forward.1} parent=1 // pred_region
      %s44 = ssub.s32 128, 128
      %45 = vsyncadd [#allocation6], %s44
      %s47 = sshll.u32 [#allocation5], 4
      %s48 = int_to_ptr.vmem [resolvable:$true] %s47
      %50 = dma.hbm_to_vmem [thread:$0]  %s1, 128, %s48, [#allocation6]
    $region9: #{lnn_vae_forward.1} parent=1 // pred_fallthru
      _
    // Predicated region
    $region10: #{lnn_vae_forward.1} parent=1 // pred_check
      _
    $region11: #{lnn_vae_forward.1} parent=1 // pred_check_branch
      %52 = sbr.rel (0) target = $region13
    $region12: #{lnn_vae_forward.1} parent=1 // pred_region
      %s54 = ssub.s32 12288, 12288
      %55 = vsyncadd [#allocation6], %s54
      %s56 = sshll.u32 [#allocation7], 4
      %s57 = int_to_ptr.vmem [resolvable:$true] %s56
      %62 = dma.hbm_to_vmem [thread:$0]  %s2, 12288, %s57, [#allocation6], 128, 128, 8
    $region13: #{lnn_vae_forward.1} parent=1 // pred_fallthru
      _
    // Predicated region
    $region14: #{lnn_vae_forward.1} parent=1 // pred_check
      _
    $region15: #{lnn_vae_forward.1} parent=1 // pred_check_branch
      %64 = sbr.rel (0) target = $region17
    $region16: #{lnn_vae_forward.1} parent=1 // pred_region
      %s66 = ssub.s32 32, 32
      %67 = vsyncadd [#allocation9], %s66
      %s69 = sshll.u32 [#allocation8], 4
      %s70 = int_to_ptr.vmem [resolvable:$true] %s69
      %72 = dma.hbm_to_vmem [thread:$0]  %s3, 32, %s70, [#allocation9]
    $region17: #{lnn_vae_forward.1} parent=1 // pred_fallthru
      _
    // Predicated region
    $region18: #{lnn_vae_forward.1} parent=1 // pred_check
      _
    $region19: #{lnn_vae_forward.1} parent=1 // pred_check_branch
      %74 = sbr.rel (0) target = $region21
    $region20: #{lnn_vae_forward.1} parent=1 // pred_region
      %s76 = ssub.s32 4096, 4096
      %77 = vsyncadd [#allocation9], %s76
      %s78 = sshll.u32 [#allocation10], 4
      %s79 = int_to_ptr.vmem [resolvable:$true] %s78
      %84 = dma.hbm_to_vmem [thread:$0]  %s4, 4096, %s79, [#allocation9], 128, 128, 8
    $region21: #{lnn_vae_forward.1} parent=1 // pred_fallthru
      _
    // Predicated region
    $region22: #{lnn_vae_forward.1} parent=1 // pred_check
      _
    $region23: #{lnn_vae_forward.1} parent=1 // pred_check_branch
      %86 = sbr.rel (0) target = $region25
    $region24: #{lnn_vae_forward.1} parent=1 // pred_region
      %s88 = ssub.s32 32, 32
      %89 = vsyncadd [#allocation12], %s88
      %s91 = sshll.u32 [#allocation11], 4
      %s92 = int_to_ptr.vmem [resolvable:$true] %s91
      %94 = dma.hbm_to_vmem [thread:$0]  %s5, 32, %s92, [#allocation12]
    $region25: #{lnn_vae_forward.1} parent=1 // pred_fallthru
      _
    // Predicated region
    $region26: #{lnn_vae_forward.1} parent=1 // pred_check
      _
    $region27: #{lnn_vae_forward.1} parent=1 // pred_check_branch
      %96 = sbr.rel (0) target = $region29
    $region28: #{lnn_vae_forward.1} parent=1 // pred_region
      %s98 = ssub.s32 4096, 4096
      %99 = vsyncadd [#allocation12], %s98
      %s100 = sshll.u32 [#allocation13], 4
      %s101 = int_to_ptr.vmem [resolvable:$true] %s100
      %106 = dma.hbm_to_vmem [thread:$0]  %s6, 4096, %s101, [#allocation12], 128, 128, 8
    $region29: #{lnn_vae_forward.1} parent=1 // pred_fallthru
      _
    // Predicated region
    $region30: #{lnn_vae_forward.1} parent=1 // pred_check
      _
    $region31: #{lnn_vae_forward.1} parent=1 // pred_check_branch
      %108 = sbr.rel (0) target = $region33
    $region32: #{lnn_vae_forward.1} parent=1 // pred_region
      %s110 = ssub.s32 32, 32
      %111 = vsyncadd [#allocation15], %s110
      %s113 = sshll.u32 [#allocation14], 4
      %s114 = int_to_ptr.vmem [resolvable:$true] %s113
      %116 = dma.hbm_to_vmem [thread:$0]  %s7, 32, %s114, [#allocation15]
    $region33: #{lnn_vae_forward.1} parent=1 // pred_fallthru
      _
    // Predicated region
    $region34: #{lnn_vae_forward.1} parent=1 // pred_check
      _
    $region35: #{lnn_vae_forward.1} parent=1 // pred_check_branch
      %118 = sbr.rel (0) target = $region37
    $region36: #{lnn_vae_forward.1} parent=1 // pred_region
      %s120 = ssub.s32 2048, 2048
      %121 = vsyncadd [#allocation15], %s120
      %s122 = sshll.u32 [#allocation16], 4
      %s123 = int_to_ptr.vmem [resolvable:$true] %s122
      %128 = dma.hbm_to_vmem [thread:$0]  %s8, 2048, %s123, [#allocation15], 128, 128, 8
    $region37: #{lnn_vae_forward.1} parent=1 // pred_fallthru
      _
    // Predicated region
    $region38: #{lnn_vae_forward.1} parent=1 // pred_check
      _
    $region39: #{lnn_vae_forward.1} parent=1 // pred_check_branch
      %130 = sbr.rel (0) target = $region41
    $region40: #{lnn_vae_forward.1} parent=1 // pred_region
      %s132 = ssub.s32 32, 32
      %133 = vsyncadd [#allocation18], %s132
      %s135 = sshll.u32 [#allocation17], 4
      %s136 = int_to_ptr.vmem [resolvable:$true] %s135
      %138 = dma.hbm_to_vmem [thread:$0]  %s9, 32, %s136, [#allocation18]
    $region41: #{lnn_vae_forward.1} parent=1 // pred_fallthru
      _
    // Predicated region
    $region42: #{lnn_vae_forward.1} parent=1 // pred_check
      _
    $region43: #{lnn_vae_forward.1} parent=1 // pred_check_branch
      %140 = sbr.rel (0) target = $region45
    $region44: #{lnn_vae_forward.1} parent=1 // pred_region
      %s142 = ssub.s32 4096, 4096
      %143 = vsyncadd [#allocation18], %s142
      %s144 = sshll.u32 [#allocation19], 4
      %s145 = int_to_ptr.vmem [resolvable:$true] %s144
      %150 = dma.hbm_to_vmem [thread:$0]  %s10, 4096, %s145, [#allocation18], 128, 128, 8
    $region45: #{lnn_vae_forward.1} parent=1 // pred_fallthru
      _
    // Predicated region
    $region46: #{lnn_vae_forward.1} parent=1 // pred_check
      _
    $region47: #{lnn_vae_forward.1} parent=1 // pred_check_branch
      %152 = sbr.rel (0) target = $region49
    $region48: #{lnn_vae_forward.1} parent=1 // pred_region
      %s154 = ssub.s32 32, 32
      %155 = vsyncadd [#allocation21], %s154
      %s157 = sshll.u32 [#allocation20], 4
      %s158 = int_to_ptr.vmem [resolvable:$true] %s157
      %160 = dma.hbm_to_vmem [thread:$0]  %s11, 32, %s158, [#allocation21]
    $region49: #{lnn_vae_forward.1} parent=1 // pred_fallthru
      _
    // Predicated region
    $region50: #{lnn_vae_forward.1} parent=1 // pred_check
      _
    $region51: #{lnn_vae_forward.1} parent=1 // pred_check_branch
      %162 = sbr.rel (0) target = $region53
    $region52: #{lnn_vae_forward.1} parent=1 // pred_region
      %s164 = ssub.s32 12288, 12288
      %165 = vsyncadd [#allocation21], %s164
      %s166 = sshll.u32 [#allocation22], 4
      %s167 = int_to_ptr.vmem [resolvable:$true] %s166
      %172 = dma.hbm_to_vmem [thread:$0]  %s12, 12288, %s167, [#allocation21], 384, 384, 24
    $region53: #{lnn_vae_forward.1} parent=1 // pred_fallthru
      _
    // Predicated region
    $region54: #{lnn_vae_forward.1} parent=1 // pred_check
      _
    $region55: #{lnn_vae_forward.1} parent=1 // pred_check_branch
      %174 = sbr.rel (0) target = $region57
    $region56: #{lnn_vae_forward.1} parent=1 // pred_region
      %s176 = ssub.s32 96, 96
      %177 = vsyncadd [#allocation24], %s176
      %s179 = sshll.u32 [#allocation23], 4
      %s180 = int_to_ptr.vmem [resolvable:$true] %s179
      %182 = dma.hbm_to_vmem [thread:$0]  %s13, 96, %s180, [#allocation24]
    $region57: #{lnn_vae_forward.1} parent=1 // pred_fallthru
      _
    // Predicated region
    $region58: #{lnn_vae_forward.1} parent=1 // pred_check
      _
    $region59: #{lnn_vae_forward.1} parent=1 // pred_check_branch
      %184 = sbr.rel (0) target = $region61
    $region60: #{lnn_vae_forward.1} parent=1 // pred_region
      %185 = dma.done [#allocation3], 768
    $region61: #{lnn_vae_forward.1} parent=1 // pred_fallthru
      _
    // Predicated region
    $region62: #{lnn_vae_forward.1} parent=1 // pred_check
      _
    $region63: #{lnn_vae_forward.1} parent=1 // pred_check_branch
      %187 = sbr.rel (0) target = $region65
    $region64: #{lnn_vae_forward.1} parent=1 // pred_region
      %188 = dma.done [#allocation6], 128
    $region65: #{lnn_vae_forward.1} parent=1 // pred_fallthru
      _
    // Predicated region
    $region66: #{lnn_vae_forward.1} parent=1 // pred_check
      _
    $region67: #{lnn_vae_forward.1} parent=1 // pred_check_branch
      %190 = sbr.rel (0) target = $region69
    $region68: #{lnn_vae_forward.1} parent=1 // pred_region
      %191 = dma.done [#allocation6], 12288
    $region69: #{lnn_vae_forward.1} parent=1 // pred_fallthru
      _
    // Predicated region
    $region70: #{lnn_vae_forward.1} parent=1 // pred_check
      _
    $region71: #{lnn_vae_forward.1} parent=1 // pred_check_branch
      %193 = sbr.rel (0) target = $region73
    $region72: #{lnn_vae_forward.1} parent=1 // pred_region
      %194 = dma.done [#allocation9], 32
    $region73: #{lnn_vae_forward.1} parent=1 // pred_fallthru
      _
    // Predicated region
    $region74: #{lnn_vae_forward.1} parent=1 // pred_check
      _
    $region75: #{lnn_vae_forward.1} parent=1 // pred_check_branch
      %196 = sbr.rel (0) target = $region77
    $region76: #{lnn_vae_forward.1} parent=1 // pred_region
      %197 = dma.done [#allocation9], 4096
    $region77: #{lnn_vae_forward.1} parent=1 // pred_fallthru
      _
    // Predicated region
    $region78: #{lnn_vae_forward.1} parent=1 // pred_check
      _
    $region79: #{lnn_vae_forward.1} parent=1 // pred_check_branch
      %199 = sbr.rel (0) target = $region81
    $region80: #{lnn_vae_forward.1} parent=1 // pred_region
      %200 = dma.done [#allocation12], 32
    $region81: #{lnn_vae_forward.1} parent=1 // pred_fallthru
      _
    // Predicated region
    $region82: #{lnn_vae_forward.1} parent=1 // pred_check
      _
    $region83: #{lnn_vae_forward.1} parent=1 // pred_check_branch
      %202 = sbr.rel (0) target = $region85
    $region84: #{lnn_vae_forward.1} parent=1 // pred_region
      %203 = dma.done [#allocation12], 4096
    $region85: #{lnn_vae_forward.1} parent=1 // pred_fallthru
      _
    // Predicated region
    $region86: #{lnn_vae_forward.1} parent=1 // pred_check
      _
    $region87: #{lnn_vae_forward.1} parent=1 // pred_check_branch
      %205 = sbr.rel (0) target = $region89
    $region88: #{lnn_vae_forward.1} parent=1 // pred_region
      %206 = dma.done [#allocation15], 32
    $region89: #{lnn_vae_forward.1} parent=1 // pred_fallthru
      _
    // Predicated region
    $region90: #{lnn_vae_forward.1} parent=1 // pred_check
      _
    $region91: #{lnn_vae_forward.1} parent=1 // pred_check_branch
      %208 = sbr.rel (0) target = $region93
    $region92: #{lnn_vae_forward.1} parent=1 // pred_region
      %209 = dma.done [#allocation15], 2048
    $region93: #{lnn_vae_forward.1} parent=1 // pred_fallthru
      _
    // Predicated region
    $region94: #{lnn_vae_forward.1} parent=1 // pred_check
      _
    $region95: #{lnn_vae_forward.1} parent=1 // pred_check_branch
      %211 = sbr.rel (0) target = $region97
    $region96: #{lnn_vae_forward.1} parent=1 // pred_region
      %212 = dma.done [#allocation18], 32
    $region97: #{lnn_vae_forward.1} parent=1 // pred_fallthru
      _
    // Predicated region
    $region98: #{lnn_vae_forward.1} parent=1 // pred_check
      _
    $region99: #{lnn_vae_forward.1} parent=1 // pred_check_branch
      %214 = sbr.rel (0) target = $region101
    $region100: #{lnn_vae_forward.1} parent=1 // pred_region
      %215 = dma.done [#allocation18], 4096
    $region101: #{lnn_vae_forward.1} parent=1 // pred_fallthru
      _
    // Predicated region
    $region102: #{lnn_vae_forward.1} parent=1 // pred_check
      _
    $region103: #{lnn_vae_forward.1} parent=1 // pred_check_branch
      %217 = sbr.rel (0) target = $region105
    $region104: #{lnn_vae_forward.1} parent=1 // pred_region
      %218 = dma.done [#allocation21], 32
    $region105: #{lnn_vae_forward.1} parent=1 // pred_fallthru
      _
    // Predicated region
    $region106: #{lnn_vae_forward.1} parent=1 // pred_check
      _
    $region107: #{lnn_vae_forward.1} parent=1 // pred_check_branch
      %220 = sbr.rel (0) target = $region109
    $region108: #{lnn_vae_forward.1} parent=1 // pred_region
      %221 = dma.done [#allocation21], 12288
    $region109: #{lnn_vae_forward.1} parent=1 // pred_fallthru
      _
    // Predicated region
    $region110: #{lnn_vae_forward.1} parent=1 // pred_check
      _
    $region111: #{lnn_vae_forward.1} parent=1 // pred_check_branch
      %223 = sbr.rel (0) target = $region113
    $region112: #{lnn_vae_forward.1} parent=1 // pred_region
      %224 = dma.done [#allocation24], 96
    $region113: #{lnn_vae_forward.1} parent=1 // pred_fallthru
      _
    %v226 = vld [vmem:[#allocation2] sm:$0xff]
    %v227 = vld [vmem:[#allocation2 + $0x8] sm:$0xff]
    %v228 = vld [vmem:[#allocation2 + $0x10] sm:$0xff]
    %v229 = vld [vmem:[#allocation2 + $0x18] sm:$0xff]
    %v230 = vld [vmem:[#allocation2 + $0x20] sm:$0xff]
    %v231 = vld [vmem:[#allocation2 + $0x28] sm:$0xff]
    %v232 = vpack.c.bf16 %v226, %v226
    %v233 = vpack.c.bf16 %v227, %v227
    %v234 = vpack.c.bf16 %v228, %v228
    %v235 = vpack.c.bf16 %v229, %v229
    %v236 = vpack.c.bf16 %v230, %v230
    %v237 = vpack.c.bf16 %v231, %v231
    %v238 = vld [vmem:[#allocation7] sm:$0xff]
    %v239 = vld [vmem:[#allocation7 + $0x8] sm:$0xff]
    %v240 = vld [vmem:[#allocation7 + $0x10] sm:$0xff]
    %v241 = vld [vmem:[#allocation7 + $0x18] sm:$0xff]
    %v242 = vld [vmem:[#allocation7 + $0x20] sm:$0xff]
    %v243 = vld [vmem:[#allocation7 + $0x28] sm:$0xff]
    %v244 = vld [vmem:[#allocation7 + $0x30] sm:$0xff]
    %v245 = vld [vmem:[#allocation7 + $0x38] sm:$0xff]
    %v246 = vld [vmem:[#allocation7 + $0x40] sm:$0xff]
    %v247 = vld [vmem:[#allocation7 + $0x48] sm:$0xff]
    %v248 = vld [vmem:[#allocation7 + $0x50] sm:$0xff]
    %v249 = vld [vmem:[#allocation7 + $0x58] sm:$0xff]
    %v250 = vld [vmem:[#allocation7 + $0x60] sm:$0xff]
    %v251 = vld [vmem:[#allocation7 + $0x68] sm:$0xff]
    %v252 = vld [vmem:[#allocation7 + $0x70] sm:$0xff]
    %v253 = vld [vmem:[#allocation7 + $0x78] sm:$0xff]
    %v254 = vld [vmem:[#allocation7 + $0x80] sm:$0xff]
    %v255 = vld [vmem:[#allocation7 + $0x88] sm:$0xff]
    %v256 = vld [vmem:[#allocation7 + $0x90] sm:$0xff]
    %v257 = vld [vmem:[#allocation7 + $0x98] sm:$0xff]
    %v258 = vld [vmem:[#allocation7 + $0xa0] sm:$0xff]
    %v259 = vld [vmem:[#allocation7 + $0xa8] sm:$0xff]
    %v260 = vld [vmem:[#allocation7 + $0xb0] sm:$0xff]
    %v261 = vld [vmem:[#allocation7 + $0xb8] sm:$0xff]
    %v262 = vld [vmem:[#allocation7 + $0xc0] sm:$0xff]
    %v263 = vld [vmem:[#allocation7 + $0xc8] sm:$0xff]
    %v264 = vld [vmem:[#allocation7 + $0xd0] sm:$0xff]
    %v265 = vld [vmem:[#allocation7 + $0xd8] sm:$0xff]
    %v266 = vld [vmem:[#allocation7 + $0xe0] sm:$0xff]
    %v267 = vld [vmem:[#allocation7 + $0xe8] sm:$0xff]
    %v268 = vld [vmem:[#allocation7 + $0xf0] sm:$0xff]
    %v269 = vld [vmem:[#allocation7 + $0xf8] sm:$0xff]
    %v270 = vld [vmem:[#allocation7 + $0x100] sm:$0xff]
    %v271 = vld [vmem:[#allocation7 + $0x108] sm:$0xff]
    %v272 = vld [vmem:[#allocation7 + $0x110] sm:$0xff]
    %v273 = vld [vmem:[#allocation7 + $0x118] sm:$0xff]
    %v274 = vld [vmem:[#allocation7 + $0x120] sm:$0xff]
    %v275 = vld [vmem:[#allocation7 + $0x128] sm:$0xff]
    %v276 = vld [vmem:[#allocation7 + $0x130] sm:$0xff]
    %v277 = vld [vmem:[#allocation7 + $0x138] sm:$0xff]
    %v278 = vld [vmem:[#allocation7 + $0x140] sm:$0xff]
    %v279 = vld [vmem:[#allocation7 + $0x148] sm:$0xff]
    %v280 = vld [vmem:[#allocation7 + $0x150] sm:$0xff]
    %v281 = vld [vmem:[#allocation7 + $0x158] sm:$0xff]
    %v282 = vld [vmem:[#allocation7 + $0x160] sm:$0xff]
    %v283 = vld [vmem:[#allocation7 + $0x168] sm:$0xff]
    %v284 = vld [vmem:[#allocation7 + $0x170] sm:$0xff]
    %v285 = vld [vmem:[#allocation7 + $0x178] sm:$0xff]
    %v286 = vld [vmem:[#allocation7 + $0x180] sm:$0xff]
    %v287 = vld [vmem:[#allocation7 + $0x188] sm:$0xff]
    %v288 = vld [vmem:[#allocation7 + $0x190] sm:$0xff]
    %v289 = vld [vmem:[#allocation7 + $0x198] sm:$0xff]
    %v290 = vld [vmem:[#allocation7 + $0x1a0] sm:$0xff]
    %v291 = vld [vmem:[#allocation7 + $0x1a8] sm:$0xff]
    %v292 = vld [vmem:[#allocation7 + $0x1b0] sm:$0xff]
    %v293 = vld [vmem:[#allocation7 + $0x1b8] sm:$0xff]
    %v294 = vld [vmem:[#allocation7 + $0x1c0] sm:$0xff]
    %v295 = vld [vmem:[#allocation7 + $0x1c8] sm:$0xff]
    %v296 = vld [vmem:[#allocation7 + $0x1d0] sm:$0xff]
    %v297 = vld [vmem:[#allocation7 + $0x1d8] sm:$0xff]
    %v298 = vld [vmem:[#allocation7 + $0x1e0] sm:$0xff]
    %v299 = vld [vmem:[#allocation7 + $0x1e8] sm:$0xff]
    %v300 = vld [vmem:[#allocation7 + $0x1f0] sm:$0xff]
    %v301 = vld [vmem:[#allocation7 + $0x1f8] sm:$0xff]
    %v302 = vld [vmem:[#allocation7 + $0x200] sm:$0xff]
    %v303 = vld [vmem:[#allocation7 + $0x208] sm:$0xff]
    %v304 = vld [vmem:[#allocation7 + $0x210] sm:$0xff]
    %v305 = vld [vmem:[#allocation7 + $0x218] sm:$0xff]
    %v306 = vld [vmem:[#allocation7 + $0x220] sm:$0xff]
    %v307 = vld [vmem:[#allocation7 + $0x228] sm:$0xff]
    %v308 = vld [vmem:[#allocation7 + $0x230] sm:$0xff]
    %v309 = vld [vmem:[#allocation7 + $0x238] sm:$0xff]
    %v310 = vld [vmem:[#allocation7 + $0x240] sm:$0xff]
    %v311 = vld [vmem:[#allocation7 + $0x248] sm:$0xff]
    %v312 = vld [vmem:[#allocation7 + $0x250] sm:$0xff]
    %v313 = vld [vmem:[#allocation7 + $0x258] sm:$0xff]
    %v314 = vld [vmem:[#allocation7 + $0x260] sm:$0xff]
    %v315 = vld [vmem:[#allocation7 + $0x268] sm:$0xff]
    %v316 = vld [vmem:[#allocation7 + $0x270] sm:$0xff]
    %v317 = vld [vmem:[#allocation7 + $0x278] sm:$0xff]
    %v318 = vld [vmem:[#allocation7 + $0x280] sm:$0xff]
    %v319 = vld [vmem:[#allocation7 + $0x288] sm:$0xff]
    %v320 = vld [vmem:[#allocation7 + $0x290] sm:$0xff]
    %v321 = vld [vmem:[#allocation7 + $0x298] sm:$0xff]
    %v322 = vld [vmem:[#allocation7 + $0x2a0] sm:$0xff]
    %v323 = vld [vmem:[#allocation7 + $0x2a8] sm:$0xff]
    %v324 = vld [vmem:[#allocation7 + $0x2b0] sm:$0xff]
    %v325 = vld [vmem:[#allocation7 + $0x2b8] sm:$0xff]
    %v326 = vld [vmem:[#allocation7 + $0x2c0] sm:$0xff]
    %v327 = vld [vmem:[#allocation7 + $0x2c8] sm:$0xff]
    %v328 = vld [vmem:[#allocation7 + $0x2d0] sm:$0xff]
    %v329 = vld [vmem:[#allocation7 + $0x2d8] sm:$0xff]
    %v330 = vld [vmem:[#allocation7 + $0x2e0] sm:$0xff]
    %v331 = vld [vmem:[#allocation7 + $0x2e8] sm:$0xff]
    %v332 = vld [vmem:[#allocation7 + $0x2f0] sm:$0xff]
    %v333 = vld [vmem:[#allocation7 + $0x2f8] sm:$0xff]
    %v334 = vld [vmem:[#allocation8] sm:$0x3]
    %v336 = vlaneseq
    %v337 = vshrl.u32 %v336, 7
    %v338 = vsub.s32 0, %v337
    %v339 = vrot.slane %v334, %v338
    %v340 = vlaneseq
    %v341 = vshrl.u32 %v340, 7
    %v342 = vsub.s32 1, %v341
    %v343 = vrot.slane %v334, %v342
    %v442 = vunpack.c.l.b16 %v238
    %v443 = vunpack.c.h.b16 %v238
    %v444 = vunpack.c.l.b16 %v239
    %v445 = vunpack.c.h.b16 %v239
    %v446 = vunpack.c.l.b16 %v240
    %v447 = vunpack.c.h.b16 %v240
    %v448 = vunpack.c.l.b16 %v241
    %v449 = vunpack.c.h.b16 %v241
    %v450 = vunpack.c.l.b16 %v242
    %v451 = vunpack.c.h.b16 %v242
    %v452 = vunpack.c.l.b16 %v243
    %v453 = vunpack.c.h.b16 %v243
    %v454 = vunpack.c.l.b16 %v244
    %v455 = vunpack.c.h.b16 %v244
    %v456 = vunpack.c.l.b16 %v245
    %v457 = vunpack.c.h.b16 %v245
    %v458 = vunpack.c.l.b16 %v246
    %v459 = vunpack.c.h.b16 %v246
    %v460 = vunpack.c.l.b16 %v247
    %v461 = vunpack.c.h.b16 %v247
    %v462 = vunpack.c.l.b16 %v248
    %v463 = vunpack.c.h.b16 %v248
    %v464 = vunpack.c.l.b16 %v249
    %v465 = vunpack.c.h.b16 %v249
    %v466 = vunpack.c.l.b16 %v250
    %v467 = vunpack.c.h.b16 %v250
    %v468 = vunpack.c.l.b16 %v251
    %v469 = vunpack.c.h.b16 %v251
    %v470 = vunpack.c.l.b16 %v252
    %v471 = vunpack.c.h.b16 %v252
    %v472 = vunpack.c.l.b16 %v253
    %v473 = vunpack.c.h.b16 %v253
    %v474 = vunpack.c.l.b16 %v254
    %v475 = vunpack.c.h.b16 %v254
    %v476 = vunpack.c.l.b16 %v255
    %v477 = vunpack.c.h.b16 %v255
    %v478 = vunpack.c.l.b16 %v256
    %v479 = vunpack.c.h.b16 %v256
    %v480 = vunpack.c.l.b16 %v257
    %v481 = vunpack.c.h.b16 %v257
    %v482 = vunpack.c.l.b16 %v258
    %v483 = vunpack.c.h.b16 %v258
    %v484 = vunpack.c.l.b16 %v259
    %v485 = vunpack.c.h.b16 %v259
    %v486 = vunpack.c.l.b16 %v260
    %v487 = vunpack.c.h.b16 %v260
    %v488 = vunpack.c.l.b16 %v261
    %v489 = vunpack.c.h.b16 %v261
    %v490 = vunpack.c.l.b16 %v262
    %v491 = vunpack.c.h.b16 %v262
    %v492 = vunpack.c.l.b16 %v263
    %v493 = vunpack.c.h.b16 %v263
    %v494 = vunpack.c.l.b16 %v264
    %v495 = vunpack.c.h.b16 %v264
    %v496 = vunpack.c.l.b16 %v265
    %v497 = vunpack.c.h.b16 %v265
    %v498 = vunpack.c.l.b16 %v266
    %v499 = vunpack.c.h.b16 %v266
    %v500 = vunpack.c.l.b16 %v267
    %v501 = vunpack.c.h.b16 %v267
    %v502 = vunpack.c.l.b16 %v268
    %v503 = vunpack.c.h.b16 %v268
    %v504 = vunpack.c.l.b16 %v269
    %v505 = vunpack.c.h.b16 %v269
    %v506 = vunpack.c.l.b16 %v270
    %v507 = vunpack.c.h.b16 %v270
    %v508 = vunpack.c.l.b16 %v271
    %v509 = vunpack.c.h.b16 %v271
    %v510 = vunpack.c.l.b16 %v272
    %v511 = vunpack.c.h.b16 %v272
    %v512 = vunpack.c.l.b16 %v273
    %v513 = vunpack.c.h.b16 %v273
    %v514 = vunpack.c.l.b16 %v274
    %v515 = vunpack.c.h.b16 %v274
    %v516 = vunpack.c.l.b16 %v275
    %v517 = vunpack.c.h.b16 %v275
    %v518 = vunpack.c.l.b16 %v276
    %v519 = vunpack.c.h.b16 %v276
    %v520 = vunpack.c.l.b16 %v277
    %v521 = vunpack.c.h.b16 %v277
    %v522 = vunpack.c.l.b16 %v278
    %v523 = vunpack.c.h.b16 %v278
    %v524 = vunpack.c.l.b16 %v279
    %v525 = vunpack.c.h.b16 %v279
    %v526 = vunpack.c.l.b16 %v280
    %v527 = vunpack.c.h.b16 %v280
    %v528 = vunpack.c.l.b16 %v281
    %v529 = vunpack.c.h.b16 %v281
    %v530 = vunpack.c.l.b16 %v282
    %v531 = vunpack.c.h.b16 %v282
    %v532 = vunpack.c.l.b16 %v283
    %v533 = vunpack.c.h.b16 %v283
    %v534 = vunpack.c.l.b16 %v284
    %v535 = vunpack.c.h.b16 %v284
    %v536 = vunpack.c.l.b16 %v285
    %v537 = vunpack.c.h.b16 %v285
    %v538 = vunpack.c.l.b16 %v286
    %v539 = vunpack.c.h.b16 %v286
    %v540 = vunpack.c.l.b16 %v287
    %v541 = vunpack.c.h.b16 %v287
    %v542 = vunpack.c.l.b16 %v288
    %v543 = vunpack.c.h.b16 %v288
    %v544 = vunpack.c.l.b16 %v289
    %v545 = vunpack.c.h.b16 %v289
    %v546 = vunpack.c.l.b16 %v290
    %v547 = vunpack.c.h.b16 %v290
    %v548 = vunpack.c.l.b16 %v291
    %v549 = vunpack.c.h.b16 %v291
    %v550 = vunpack.c.l.b16 %v292
    %v551 = vunpack.c.h.b16 %v292
    %v552 = vunpack.c.l.b16 %v293
    %v553 = vunpack.c.h.b16 %v293
    %v554 = vunpack.c.l.b16 %v294
    %v555 = vunpack.c.h.b16 %v294
    %v556 = vunpack.c.l.b16 %v295
    %v557 = vunpack.c.h.b16 %v295
    %v558 = vunpack.c.l.b16 %v296
    %v559 = vunpack.c.h.b16 %v296
    %v560 = vunpack.c.l.b16 %v297
    %v561 = vunpack.c.h.b16 %v297
    %v562 = vunpack.c.l.b16 %v298
    %v563 = vunpack.c.h.b16 %v298
    %v564 = vunpack.c.l.b16 %v299
    %v565 = vunpack.c.h.b16 %v299
    %v566 = vunpack.c.l.b16 %v300
    %v567 = vunpack.c.h.b16 %v300
    %v568 = vunpack.c.l.b16 %v301
    %v569 = vunpack.c.h.b16 %v301
    %v570 = vunpack.c.l.b16 %v302
    %v571 = vunpack.c.h.b16 %v302
    %v572 = vunpack.c.l.b16 %v303
    %v573 = vunpack.c.h.b16 %v303
    %v574 = vunpack.c.l.b16 %v304
    %v575 = vunpack.c.h.b16 %v304
    %v576 = vunpack.c.l.b16 %v305
    %v577 = vunpack.c.h.b16 %v305
    %v578 = vunpack.c.l.b16 %v306
    %v579 = vunpack.c.h.b16 %v306
    %v580 = vunpack.c.l.b16 %v307
    %v581 = vunpack.c.h.b16 %v307
    %v582 = vunpack.c.l.b16 %v308
    %v583 = vunpack.c.h.b16 %v308
    %v584 = vunpack.c.l.b16 %v309
    %v585 = vunpack.c.h.b16 %v309
    %v586 = vunpack.c.l.b16 %v310
    %v587 = vunpack.c.h.b16 %v310
    %v588 = vunpack.c.l.b16 %v311
    %v589 = vunpack.c.h.b16 %v311
    %v590 = vunpack.c.l.b16 %v312
    %v591 = vunpack.c.h.b16 %v312
    %v592 = vunpack.c.l.b16 %v313
    %v593 = vunpack.c.h.b16 %v313
    %v594 = vunpack.c.l.b16 %v314
    %v595 = vunpack.c.h.b16 %v314
    %v596 = vunpack.c.l.b16 %v315
    %v597 = vunpack.c.h.b16 %v315
    %v598 = vunpack.c.l.b16 %v316
    %v599 = vunpack.c.h.b16 %v316
    %v600 = vunpack.c.l.b16 %v317
    %v601 = vunpack.c.h.b16 %v317
    %v602 = vunpack.c.l.b16 %v318
    %v603 = vunpack.c.h.b16 %v318
    %v604 = vunpack.c.l.b16 %v319
    %v605 = vunpack.c.h.b16 %v319
    %v606 = vunpack.c.l.b16 %v320
    %v607 = vunpack.c.h.b16 %v320
    %v608 = vunpack.c.l.b16 %v321
    %v609 = vunpack.c.h.b16 %v321
    %v610 = vunpack.c.l.b16 %v322
    %v611 = vunpack.c.h.b16 %v322
    %v612 = vunpack.c.l.b16 %v323
    %v613 = vunpack.c.h.b16 %v323
    %v614 = vunpack.c.l.b16 %v324
    %v615 = vunpack.c.h.b16 %v324
    %v616 = vunpack.c.l.b16 %v325
    %v617 = vunpack.c.h.b16 %v325
    %v618 = vunpack.c.l.b16 %v326
    %v619 = vunpack.c.h.b16 %v326
    %v620 = vunpack.c.l.b16 %v327
    %v621 = vunpack.c.h.b16 %v327
    %v622 = vunpack.c.l.b16 %v328
    %v623 = vunpack.c.h.b16 %v328
    %v624 = vunpack.c.l.b16 %v329
    %v625 = vunpack.c.h.b16 %v329
    %v626 = vunpack.c.l.b16 %v330
    %v627 = vunpack.c.h.b16 %v330
    %v628 = vunpack.c.l.b16 %v331
    %v629 = vunpack.c.h.b16 %v331
    %v630 = vunpack.c.l.b16 %v332
    %v631 = vunpack.c.h.b16 %v332
    %v632 = vunpack.c.l.b16 %v333
    %v633 = vunpack.c.h.b16 %v333
    %v634 = vpack.c.b16 %v444, %v442
    %v635 = vpack.c.b16 %v445, %v443
    %v636 = vpack.c.b16 %v448, %v446
    %v637 = vpack.c.b16 %v449, %v447
    %v638 = vpack.c.b16 %v452, %v450
    %v639 = vpack.c.b16 %v453, %v451
    %v640 = vpack.c.b16 %v456, %v454
    %v641 = vpack.c.b16 %v457, %v455
    %v642 = vpack.c.b16 %v460, %v458
    %v643 = vpack.c.b16 %v461, %v459
    %v644 = vpack.c.b16 %v464, %v462
    %v645 = vpack.c.b16 %v465, %v463
    %v646 = vpack.c.b16 %v468, %v466
    %v647 = vpack.c.b16 %v469, %v467
    %v648 = vpack.c.b16 %v472, %v470
    %v649 = vpack.c.b16 %v473, %v471
    %v650 = vpack.c.b16 %v476, %v474
    %v651 = vpack.c.b16 %v477, %v475
    %v652 = vpack.c.b16 %v480, %v478
    %v653 = vpack.c.b16 %v481, %v479
    %v654 = vpack.c.b16 %v484, %v482
    %v655 = vpack.c.b16 %v485, %v483
    %v656 = vpack.c.b16 %v488, %v486
    %v657 = vpack.c.b16 %v489, %v487
    %v658 = vpack.c.b16 %v492, %v490
    %v659 = vpack.c.b16 %v493, %v491
    %v660 = vpack.c.b16 %v496, %v494
    %v661 = vpack.c.b16 %v497, %v495
    %v662 = vpack.c.b16 %v500, %v498
    %v663 = vpack.c.b16 %v501, %v499
    %v664 = vpack.c.b16 %v504, %v502
    %v665 = vpack.c.b16 %v505, %v503
    %v666 = vpack.c.b16 %v508, %v506
    %v667 = vpack.c.b16 %v509, %v507
    %v668 = vpack.c.b16 %v512, %v510
    %v669 = vpack.c.b16 %v513, %v511
    %v670 = vpack.c.b16 %v516, %v514
    %v671 = vpack.c.b16 %v517, %v515
    %v672 = vpack.c.b16 %v520, %v518
    %v673 = vpack.c.b16 %v521, %v519
    %v674 = vpack.c.b16 %v524, %v522
    %v675 = vpack.c.b16 %v525, %v523
    %v676 = vpack.c.b16 %v528, %v526
    %v677 = vpack.c.b16 %v529, %v527
    %v678 = vpack.c.b16 %v532, %v530
    %v679 = vpack.c.b16 %v533, %v531
    %v680 = vpack.c.b16 %v536, %v534
    %v681 = vpack.c.b16 %v537, %v535
    %v682 = vpack.c.b16 %v540, %v538
    %v683 = vpack.c.b16 %v541, %v539
    %v684 = vpack.c.b16 %v544, %v542
    %v685 = vpack.c.b16 %v545, %v543
    %v686 = vpack.c.b16 %v548, %v546
    %v687 = vpack.c.b16 %v549, %v547
    %v688 = vpack.c.b16 %v552, %v550
    %v689 = vpack.c.b16 %v553, %v551
    %v690 = vpack.c.b16 %v556, %v554
    %v691 = vpack.c.b16 %v557, %v555
    %v692 = vpack.c.b16 %v560, %v558
    %v693 = vpack.c.b16 %v561, %v559
    %v694 = vpack.c.b16 %v564, %v562
    %v695 = vpack.c.b16 %v565, %v563
    %v696 = vpack.c.b16 %v568, %v566
    %v697 = vpack.c.b16 %v569, %v567
    %v698 = vpack.c.b16 %v572, %v570
    %v699 = vpack.c.b16 %v573, %v571
    %v700 = vpack.c.b16 %v576, %v574
    %v701 = vpack.c.b16 %v577, %v575
    %v702 = vpack.c.b16 %v580, %v578
    %v703 = vpack.c.b16 %v581, %v579
    %v704 = vpack.c.b16 %v584, %v582
    %v705 = vpack.c.b16 %v585, %v583
    %v706 = vpack.c.b16 %v588, %v586
    %v707 = vpack.c.b16 %v589, %v587
    %v708 = vpack.c.b16 %v592, %v590
    %v709 = vpack.c.b16 %v593, %v591
    %v710 = vpack.c.b16 %v596, %v594
    %v711 = vpack.c.b16 %v597, %v595
    %v712 = vpack.c.b16 %v600, %v598
    %v713 = vpack.c.b16 %v601, %v599
    %v714 = vpack.c.b16 %v604, %v602
    %v715 = vpack.c.b16 %v605, %v603
    %v716 = vpack.c.b16 %v608, %v606
    %v717 = vpack.c.b16 %v609, %v607
    %v718 = vpack.c.b16 %v612, %v610
    %v719 = vpack.c.b16 %v613, %v611
    %v720 = vpack.c.b16 %v616, %v614
    %v721 = vpack.c.b16 %v617, %v615
    %v722 = vpack.c.b16 %v620, %v618
    %v723 = vpack.c.b16 %v621, %v619
    %v724 = vpack.c.b16 %v624, %v622
    %v725 = vpack.c.b16 %v625, %v623
    %v726 = vpack.c.b16 %v628, %v626
    %v727 = vpack.c.b16 %v629, %v627
    %v728 = vpack.c.b16 %v632, %v630
    %v729 = vpack.c.b16 %v633, %v631
    %826 = vmatprep.subr.bf16.mxu0 %v635
    %827 = vmatpush1.bf16.msra.mxu0 %v634
    %828 = vmatprep.subr.bf16.mxu0 %v637
    %829 = vmatpush1.bf16.msra.mxu0 %v636
    %830 = vmatprep.subr.bf16.mxu0 %v639
    %831 = vmatpush1.bf16.msra.mxu0 %v638
    %832 = vmatprep.subr.bf16.mxu0 %v641
    %833 = vmatpush1.bf16.msra.mxu0 %v640
    %834 = vmatprep.subr.bf16.mxu0 %v643
    %835 = vmatpush1.bf16.msra.mxu0 %v642
    %836 = vmatprep.subr.bf16.mxu0 %v645
    %837 = vmatpush1.bf16.msra.mxu0 %v644
    %838 = vmatprep.subr.bf16.mxu0 %v647
    %839 = vmatpush1.bf16.msra.mxu0 %v646
    %840 = vmatprep.subr.bf16.mxu0 %v649
    %841 = vmatpush1.bf16.msra.mxu0 %v648
    %842 = vmatprep.subr.bf16.mxu0 %v651
    %843 = vmatpush1.bf16.msra.mxu0 %v650
    %844 = vmatprep.subr.bf16.mxu0 %v653
    %845 = vmatpush1.bf16.msra.mxu0 %v652
    %846 = vmatprep.subr.bf16.mxu0 %v655
    %847 = vmatpush1.bf16.msra.mxu0 %v654
    %848 = vmatprep.subr.bf16.mxu0 %v657
    %849 = vmatpush1.bf16.msra.mxu0 %v656
    %850 = vmatprep.subr.bf16.mxu0 %v659
    %851 = vmatpush1.bf16.msra.mxu0 %v658
    %852 = vmatprep.subr.bf16.mxu0 %v661
    %853 = vmatpush1.bf16.msra.mxu0 %v660
    %854 = vmatprep.subr.bf16.mxu0 %v663
    %855 = vmatpush1.bf16.msra.mxu0 %v662
    %856 = vmatprep.subr.bf16.mxu0 %v665
    %857 = vmatpush1.bf16.msra.mxu0 %v664
    %858 = vmatprep.mubr.bf16.mxu0 %v233
    %859 = vmatmul.mubr.bf16.gmra.mrb[0].mxu0 %v232
    %v860 = vpop.f32.mrb[0].mxu0
    %v861 = vadd.f32 %v339, %v860
    %v862 = vpop.f32.mrb[0].mxu0
    %v863 = vadd.f32 %v343, %v862
    %v864 = vpop.f32.mrb[0].mxu0
    %v865 = vpop.f32.mrb[0].mxu0
    %866 = vdwg.mxu0
    %867 = vmatprep.subr.bf16.mxu0 %v667
    %868 = vmatpush1.bf16.msra.mxu0 %v666
    %869 = vmatprep.subr.bf16.mxu0 %v669
    %870 = vmatpush1.bf16.msra.mxu0 %v668
    %871 = vmatprep.subr.bf16.mxu0 %v671
    %872 = vmatpush1.bf16.msra.mxu0 %v670
    %873 = vmatprep.subr.bf16.mxu0 %v673
    %874 = vmatpush1.bf16.msra.mxu0 %v672
    %875 = vmatprep.subr.bf16.mxu0 %v675
    %876 = vmatpush1.bf16.msra.mxu0 %v674
    %877 = vmatprep.subr.bf16.mxu0 %v677
    %878 = vmatpush1.bf16.msra.mxu0 %v676
    %879 = vmatprep.subr.bf16.mxu0 %v679
    %880 = vmatpush1.bf16.msra.mxu0 %v678
    %881 = vmatprep.subr.bf16.mxu0 %v681
    %882 = vmatpush1.bf16.msra.mxu0 %v680
    %883 = vmatprep.subr.bf16.mxu0 %v683
    %884 = vmatpush1.bf16.msra.mxu0 %v682
    %885 = vmatprep.subr.bf16.mxu0 %v685
    %886 = vmatpush1.bf16.msra.mxu0 %v684
    %887 = vmatprep.subr.bf16.mxu0 %v687
    %888 = vmatpush1.bf16.msra.mxu0 %v686
    %889 = vmatprep.subr.bf16.mxu0 %v689
    %890 = vmatpush1.bf16.msra.mxu0 %v688
    %891 = vmatprep.subr.bf16.mxu0 %v691
    %892 = vmatpush1.bf16.msra.mxu0 %v690
    %893 = vmatprep.subr.bf16.mxu0 %v693
    %894 = vmatpush1.bf16.msra.mxu0 %v692
    %895 = vmatprep.subr.bf16.mxu0 %v695
    %896 = vmatpush1.bf16.msra.mxu0 %v694
    %897 = vmatprep.subr.bf16.mxu0 %v697
    %898 = vmatpush1.bf16.msra.mxu0 %v696
    %899 = vmatprep.mubr.bf16.mxu0 %v235
    %900 = vmatmul.mubr.bf16.gmra.mrb[0].mxu0 %v234
    %v901 = vpop.f32.mrb[0].mxu0
    %v902 = vadd.f32 %v861, %v901
    %v903 = vpop.f32.mrb[0].mxu0
    %v904 = vadd.f32 %v863, %v903
    %v905 = vpop.f32.mrb[0].mxu0
    %v906 = vpop.f32.mrb[0].mxu0
    %907 = vdwg.mxu0
    %908 = vmatprep.subr.bf16.mxu0 %v699
    %909 = vmatpush1.bf16.msra.mxu0 %v698
    %910 = vmatprep.subr.bf16.mxu0 %v701
    %911 = vmatpush1.bf16.msra.mxu0 %v700
    %912 = vmatprep.subr.bf16.mxu0 %v703
    %913 = vmatpush1.bf16.msra.mxu0 %v702
    %914 = vmatprep.subr.bf16.mxu0 %v705
    %915 = vmatpush1.bf16.msra.mxu0 %v704
    %916 = vmatprep.subr.bf16.mxu0 %v707
    %917 = vmatpush1.bf16.msra.mxu0 %v706
    %918 = vmatprep.subr.bf16.mxu0 %v709
    %919 = vmatpush1.bf16.msra.mxu0 %v708
    %920 = vmatprep.subr.bf16.mxu0 %v711
    %921 = vmatpush1.bf16.msra.mxu0 %v710
    %922 = vmatprep.subr.bf16.mxu0 %v713
    %923 = vmatpush1.bf16.msra.mxu0 %v712
    %924 = vmatprep.subr.bf16.mxu0 %v715
    %925 = vmatpush1.bf16.msra.mxu0 %v714
    %926 = vmatprep.subr.bf16.mxu0 %v717
    %927 = vmatpush1.bf16.msra.mxu0 %v716
    %928 = vmatprep.subr.bf16.mxu0 %v719
    %929 = vmatpush1.bf16.msra.mxu0 %v718
    %930 = vmatprep.subr.bf16.mxu0 %v721
    %931 = vmatpush1.bf16.msra.mxu0 %v720
    %932 = vmatprep.subr.bf16.mxu0 %v723
    %933 = vmatpush1.bf16.msra.mxu0 %v722
    %934 = vmatprep.subr.bf16.mxu0 %v725
    %935 = vmatpush1.bf16.msra.mxu0 %v724
    %936 = vmatprep.subr.bf16.mxu0 %v727
    %937 = vmatpush1.bf16.msra.mxu0 %v726
    %938 = vmatprep.subr.bf16.mxu0 %v729
    %939 = vmatpush1.bf16.msra.mxu0 %v728
    %940 = vmatprep.mubr.bf16.mxu0 %v237
    %941 = vmatmul.mubr.bf16.gmra.mrb[0].mxu0 %v236
    %v942 = vpop.f32.mrb[0].mxu0
    %v943 = vadd.f32 %v902, %v942
    %v944 = vpop.f32.mrb[0].mxu0
    %v945 = vadd.f32 %v904, %v944
    %v946 = vpop.f32.mrb[0].mxu0
    %v947 = vpop.f32.mrb[0].mxu0
    %948 = vdwg.mxu0
    %vm949 = vcmp.ge.f32.partialorder %v943, 0.0
    %vm950 = vcmp.ge.f32.partialorder %v945, 0.0
    %v951 = vmul.f32 %v943, 0.01
    %v952 = vmul.f32 %v945, 0.01
    %v953 = vsel %vm949, %v943, %v951
    %v954 = vsel %vm950, %v945, %v952
    %v955 = vpack.c.bf16 %v953, %v953
    %v956 = vpack.c.bf16 %v954, %v954
    %v957 = vld [vmem:[#allocation10] sm:$0xff]
    %v958 = vld [vmem:[#allocation10 + $0x8] sm:$0xff]
    %v959 = vld [vmem:[#allocation10 + $0x10] sm:$0xff]
    %v960 = vld [vmem:[#allocation10 + $0x18] sm:$0xff]
    %v961 = vld [vmem:[#allocation10 + $0x20] sm:$0xff]
    %v962 = vld [vmem:[#allocation10 + $0x28] sm:$0xff]
    %v963 = vld [vmem:[#allocation10 + $0x30] sm:$0xff]
    %v964 = vld [vmem:[#allocation10 + $0x38] sm:$0xff]
    %v965 = vld [vmem:[#allocation10 + $0x40] sm:$0xff]
    %v966 = vld [vmem:[#allocation10 + $0x48] sm:$0xff]
    %v967 = vld [vmem:[#allocation10 + $0x50] sm:$0xff]
    %v968 = vld [vmem:[#allocation10 + $0x58] sm:$0xff]
    %v969 = vld [vmem:[#allocation10 + $0x60] sm:$0xff]
    %v970 = vld [vmem:[#allocation10 + $0x68] sm:$0xff]
    %v971 = vld [vmem:[#allocation10 + $0x70] sm:$0xff]
    %v972 = vld [vmem:[#allocation10 + $0x78] sm:$0xff]
    %v973 = vld [vmem:[#allocation10 + $0x80] sm:$0xff]
    %v974 = vld [vmem:[#allocation10 + $0x88] sm:$0xff]
    %v975 = vld [vmem:[#allocation10 + $0x90] sm:$0xff]
    %v976 = vld [vmem:[#allocation10 + $0x98] sm:$0xff]
    %v977 = vld [vmem:[#allocation10 + $0xa0] sm:$0xff]
    %v978 = vld [vmem:[#allocation10 + $0xa8] sm:$0xff]
    %v979 = vld [vmem:[#allocation10 + $0xb0] sm:$0xff]
    %v980 = vld [vmem:[#allocation10 + $0xb8] sm:$0xff]
    %v981 = vld [vmem:[#allocation10 + $0xc0] sm:$0xff]
    %v982 = vld [vmem:[#allocation10 + $0xc8] sm:$0xff]
    %v983 = vld [vmem:[#allocation10 + $0xd0] sm:$0xff]
    %v984 = vld [vmem:[#allocation10 + $0xd8] sm:$0xff]
    %v985 = vld [vmem:[#allocation10 + $0xe0] sm:$0xff]
    %v986 = vld [vmem:[#allocation10 + $0xe8] sm:$0xff]
    %v987 = vld [vmem:[#allocation10 + $0xf0] sm:$0xff]
    %v988 = vld [vmem:[#allocation10 + $0xf8] sm:$0xff]
    %v989 = vld [vmem:[#allocation11] sm:$0x3]
    %v991 = vlaneseq
    %v992 = vshrl.u32 %v991, 7
    %v993 = vsub.s32 0, %v992
    %v994 = vrot.slane %v989, %v993
    %v995 = vlaneseq
    %v996 = vshrl.u32 %v995, 7
    %v997 = vsub.s32 1, %v996
    %v998 = vrot.slane %v989, %v997
    %v1033 = vunpack.c.l.b16 %v957
    %v1034 = vunpack.c.h.b16 %v957
    %v1035 = vunpack.c.l.b16 %v958
    %v1036 = vunpack.c.h.b16 %v958
    %v1037 = vunpack.c.l.b16 %v959
    %v1038 = vunpack.c.h.b16 %v959
    %v1039 = vunpack.c.l.b16 %v960
    %v1040 = vunpack.c.h.b16 %v960
    %v1041 = vunpack.c.l.b16 %v961
    %v1042 = vunpack.c.h.b16 %v961
    %v1043 = vunpack.c.l.b16 %v962
    %v1044 = vunpack.c.h.b16 %v962
    %v1045 = vunpack.c.l.b16 %v963
    %v1046 = vunpack.c.h.b16 %v963
    %v1047 = vunpack.c.l.b16 %v964
    %v1048 = vunpack.c.h.b16 %v964
    %v1049 = vunpack.c.l.b16 %v965
    %v1050 = vunpack.c.h.b16 %v965
    %v1051 = vunpack.c.l.b16 %v966
    %v1052 = vunpack.c.h.b16 %v966
    %v1053 = vunpack.c.l.b16 %v967
    %v1054 = vunpack.c.h.b16 %v967
    %v1055 = vunpack.c.l.b16 %v968
    %v1056 = vunpack.c.h.b16 %v968
    %v1057 = vunpack.c.l.b16 %v969
    %v1058 = vunpack.c.h.b16 %v969
    %v1059 = vunpack.c.l.b16 %v970
    %v1060 = vunpack.c.h.b16 %v970
    %v1061 = vunpack.c.l.b16 %v971
    %v1062 = vunpack.c.h.b16 %v971
    %v1063 = vunpack.c.l.b16 %v972
    %v1064 = vunpack.c.h.b16 %v972
    %v1065 = vunpack.c.l.b16 %v973
    %v1066 = vunpack.c.h.b16 %v973
    %v1067 = vunpack.c.l.b16 %v974
    %v1068 = vunpack.c.h.b16 %v974
    %v1069 = vunpack.c.l.b16 %v975
    %v1070 = vunpack.c.h.b16 %v975
    %v1071 = vunpack.c.l.b16 %v976
    %v1072 = vunpack.c.h.b16 %v976
    %v1073 = vunpack.c.l.b16 %v977
    %v1074 = vunpack.c.h.b16 %v977
    %v1075 = vunpack.c.l.b16 %v978
    %v1076 = vunpack.c.h.b16 %v978
    %v1077 = vunpack.c.l.b16 %v979
    %v1078 = vunpack.c.h.b16 %v979
    %v1079 = vunpack.c.l.b16 %v980
    %v1080 = vunpack.c.h.b16 %v980
    %v1081 = vunpack.c.l.b16 %v981
    %v1082 = vunpack.c.h.b16 %v981
    %v1083 = vunpack.c.l.b16 %v982
    %v1084 = vunpack.c.h.b16 %v982
    %v1085 = vunpack.c.l.b16 %v983
    %v1086 = vunpack.c.h.b16 %v983
    %v1087 = vunpack.c.l.b16 %v984
    %v1088 = vunpack.c.h.b16 %v984
    %v1089 = vunpack.c.l.b16 %v985
    %v1090 = vunpack.c.h.b16 %v985
    %v1091 = vunpack.c.l.b16 %v986
    %v1092 = vunpack.c.h.b16 %v986
    %v1093 = vunpack.c.l.b16 %v987
    %v1094 = vunpack.c.h.b16 %v987
    %v1095 = vunpack.c.l.b16 %v988
    %v1096 = vunpack.c.h.b16 %v988
    %v1097 = vpack.c.b16 %v1035, %v1033
    %v1098 = vpack.c.b16 %v1036, %v1034
    %v1099 = vpack.c.b16 %v1039, %v1037
    %v1100 = vpack.c.b16 %v1040, %v1038
    %v1101 = vpack.c.b16 %v1043, %v1041
    %v1102 = vpack.c.b16 %v1044, %v1042
    %v1103 = vpack.c.b16 %v1047, %v1045
    %v1104 = vpack.c.b16 %v1048, %v1046
    %v1105 = vpack.c.b16 %v1051, %v1049
    %v1106 = vpack.c.b16 %v1052, %v1050
    %v1107 = vpack.c.b16 %v1055, %v1053
    %v1108 = vpack.c.b16 %v1056, %v1054
    %v1109 = vpack.c.b16 %v1059, %v1057
    %v1110 = vpack.c.b16 %v1060, %v1058
    %v1111 = vpack.c.b16 %v1063, %v1061
    %v1112 = vpack.c.b16 %v1064, %v1062
    %v1113 = vpack.c.b16 %v1067, %v1065
    %v1114 = vpack.c.b16 %v1068, %v1066
    %v1115 = vpack.c.b16 %v1071, %v1069
    %v1116 = vpack.c.b16 %v1072, %v1070
    %v1117 = vpack.c.b16 %v1075, %v1073
    %v1118 = vpack.c.b16 %v1076, %v1074
    %v1119 = vpack.c.b16 %v1079, %v1077
    %v1120 = vpack.c.b16 %v1080, %v1078
    %v1121 = vpack.c.b16 %v1083, %v1081
    %v1122 = vpack.c.b16 %v1084, %v1082
    %v1123 = vpack.c.b16 %v1087, %v1085
    %v1124 = vpack.c.b16 %v1088, %v1086
    %v1125 = vpack.c.b16 %v1091, %v1089
    %v1126 = vpack.c.b16 %v1092, %v1090
    %v1127 = vpack.c.b16 %v1095, %v1093
    %v1128 = vpack.c.b16 %v1096, %v1094
    %1161 = vmatprep.subr.bf16.mxu0 %v1098
    %1162 = vmatpush1.bf16.msra.mxu0 %v1097
    %1163 = vmatprep.subr.bf16.mxu0 %v1100
    %1164 = vmatpush1.bf16.msra.mxu0 %v1099
    %1165 = vmatprep.subr.bf16.mxu0 %v1102
    %1166 = vmatpush1.bf16.msra.mxu0 %v1101
    %1167 = vmatprep.subr.bf16.mxu0 %v1104
    %1168 = vmatpush1.bf16.msra.mxu0 %v1103
    %1169 = vmatprep.subr.bf16.mxu0 %v1106
    %1170 = vmatpush1.bf16.msra.mxu0 %v1105
    %1171 = vmatprep.subr.bf16.mxu0 %v1108
    %1172 = vmatpush1.bf16.msra.mxu0 %v1107
    %1173 = vmatprep.subr.bf16.mxu0 %v1110
    %1174 = vmatpush1.bf16.msra.mxu0 %v1109
    %1175 = vmatprep.subr.bf16.mxu0 %v1112
    %1176 = vmatpush1.bf16.msra.mxu0 %v1111
    %1177 = vmatprep.subr.bf16.mxu0 %v1114
    %1178 = vmatpush1.bf16.msra.mxu0 %v1113
    %1179 = vmatprep.subr.bf16.mxu0 %v1116
    %1180 = vmatpush1.bf16.msra.mxu0 %v1115
    %1181 = vmatprep.subr.bf16.mxu0 %v1118
    %1182 = vmatpush1.bf16.msra.mxu0 %v1117
    %1183 = vmatprep.subr.bf16.mxu0 %v1120
    %1184 = vmatpush1.bf16.msra.mxu0 %v1119
    %1185 = vmatprep.subr.bf16.mxu0 %v1122
    %1186 = vmatpush1.bf16.msra.mxu0 %v1121
    %1187 = vmatprep.subr.bf16.mxu0 %v1124
    %1188 = vmatpush1.bf16.msra.mxu0 %v1123
    %1189 = vmatprep.subr.bf16.mxu0 %v1126
    %1190 = vmatpush1.bf16.msra.mxu0 %v1125
    %1191 = vmatprep.subr.bf16.mxu0 %v1128
    %1192 = vmatpush1.bf16.msra.mxu0 %v1127
    %1193 = vmatprep.mubr.bf16.mxu0 %v956
    %1194 = vmatmul.mubr.bf16.gmra.mrb[0].mxu0 %v955
    %v1195 = vpop.f32.mrb[0].mxu0
    %v1196 = vadd.f32 %v994, %v1195
    %v1197 = vpop.f32.mrb[0].mxu0
    %v1198 = vadd.f32 %v998, %v1197
    %v1199 = vpop.f32.mrb[0].mxu0
    %v1200 = vpop.f32.mrb[0].mxu0
    %1201 = vdwg.mxu0
    %vm1202 = vcmp.ge.f32.partialorder %v1196, 0.0
    %vm1203 = vcmp.ge.f32.partialorder %v1198, 0.0
    %v1204 = vmul.f32 %v1196, 0.01
    %v1205 = vmul.f32 %v1198, 0.01
    %v1206 = vsel %vm1202, %v1196, %v1204
    %v1207 = vsel %vm1203, %v1198, %v1205
    %v1208 = vpack.c.bf16 %v1206, %v1206
    %v1209 = vpack.c.bf16 %v1207, %v1207
    %v1210 = vld [vmem:[#allocation13] sm:$0xff]
    %v1211 = vld [vmem:[#allocation13 + $0x8] sm:$0xff]
    %v1212 = vld [vmem:[#allocation13 + $0x10] sm:$0xff]
    %v1213 = vld [vmem:[#allocation13 + $0x18] sm:$0xff]
    %v1214 = vld [vmem:[#allocation13 + $0x20] sm:$0xff]
    %v1215 = vld [vmem:[#allocation13 + $0x28] sm:$0xff]
    %v1216 = vld [vmem:[#allocation13 + $0x30] sm:$0xff]
    %v1217 = vld [vmem:[#allocation13 + $0x38] sm:$0xff]
    %v1218 = vld [vmem:[#allocation13 + $0x40] sm:$0xff]
    %v1219 = vld [vmem:[#allocation13 + $0x48] sm:$0xff]
    %v1220 = vld [vmem:[#allocation13 + $0x50] sm:$0xff]
    %v1221 = vld [vmem:[#allocation13 + $0x58] sm:$0xff]
    %v1222 = vld [vmem:[#allocation13 + $0x60] sm:$0xff]
    %v1223 = vld [vmem:[#allocation13 + $0x68] sm:$0xff]
    %v1224 = vld [vmem:[#allocation13 + $0x70] sm:$0xff]
    %v1225 = vld [vmem:[#allocation13 + $0x78] sm:$0xff]
    %v1226 = vld [vmem:[#allocation13 + $0x80] sm:$0xff]
    %v1227 = vld [vmem:[#allocation13 + $0x88] sm:$0xff]
    %v1228 = vld [vmem:[#allocation13 + $0x90] sm:$0xff]
    %v1229 = vld [vmem:[#allocation13 + $0x98] sm:$0xff]
    %v1230 = vld [vmem:[#allocation13 + $0xa0] sm:$0xff]
    %v1231 = vld [vmem:[#allocation13 + $0xa8] sm:$0xff]
    %v1232 = vld [vmem:[#allocation13 + $0xb0] sm:$0xff]
    %v1233 = vld [vmem:[#allocation13 + $0xb8] sm:$0xff]
    %v1234 = vld [vmem:[#allocation13 + $0xc0] sm:$0xff]
    %v1235 = vld [vmem:[#allocation13 + $0xc8] sm:$0xff]
    %v1236 = vld [vmem:[#allocation13 + $0xd0] sm:$0xff]
    %v1237 = vld [vmem:[#allocation13 + $0xd8] sm:$0xff]
    %v1238 = vld [vmem:[#allocation13 + $0xe0] sm:$0xff]
    %v1239 = vld [vmem:[#allocation13 + $0xe8] sm:$0xff]
    %v1240 = vld [vmem:[#allocation13 + $0xf0] sm:$0xff]
    %v1241 = vld [vmem:[#allocation13 + $0xf8] sm:$0xff]
    %v1242 = vld [vmem:[#allocation14] sm:$0x3]
    %v1244 = vlaneseq
    %v1245 = vshrl.u32 %v1244, 7
    %v1246 = vsub.s32 0, %v1245
    %v1247 = vrot.slane %v1242, %v1246
    %v1248 = vlaneseq
    %v1249 = vshrl.u32 %v1248, 7
    %v1250 = vsub.s32 1, %v1249
    %v1251 = vrot.slane %v1242, %v1250
    %v1286 = vunpack.c.l.b16 %v1210
    %v1287 = vunpack.c.h.b16 %v1210
    %v1288 = vunpack.c.l.b16 %v1211
    %v1289 = vunpack.c.h.b16 %v1211
    %v1290 = vunpack.c.l.b16 %v1212
    %v1291 = vunpack.c.h.b16 %v1212
    %v1292 = vunpack.c.l.b16 %v1213
    %v1293 = vunpack.c.h.b16 %v1213
    %v1294 = vunpack.c.l.b16 %v1214
    %v1295 = vunpack.c.h.b16 %v1214
    %v1296 = vunpack.c.l.b16 %v1215
    %v1297 = vunpack.c.h.b16 %v1215
    %v1298 = vunpack.c.l.b16 %v1216
    %v1299 = vunpack.c.h.b16 %v1216
    %v1300 = vunpack.c.l.b16 %v1217
    %v1301 = vunpack.c.h.b16 %v1217
    %v1302 = vunpack.c.l.b16 %v1218
    %v1303 = vunpack.c.h.b16 %v1218
    %v1304 = vunpack.c.l.b16 %v1219
    %v1305 = vunpack.c.h.b16 %v1219
    %v1306 = vunpack.c.l.b16 %v1220
    %v1307 = vunpack.c.h.b16 %v1220
    %v1308 = vunpack.c.l.b16 %v1221
    %v1309 = vunpack.c.h.b16 %v1221
    %v1310 = vunpack.c.l.b16 %v1222
    %v1311 = vunpack.c.h.b16 %v1222
    %v1312 = vunpack.c.l.b16 %v1223
    %v1313 = vunpack.c.h.b16 %v1223
    %v1314 = vunpack.c.l.b16 %v1224
    %v1315 = vunpack.c.h.b16 %v1224
    %v1316 = vunpack.c.l.b16 %v1225
    %v1317 = vunpack.c.h.b16 %v1225
    %v1318 = vunpack.c.l.b16 %v1226
    %v1319 = vunpack.c.h.b16 %v1226
    %v1320 = vunpack.c.l.b16 %v1227
    %v1321 = vunpack.c.h.b16 %v1227
    %v1322 = vunpack.c.l.b16 %v1228
    %v1323 = vunpack.c.h.b16 %v1228
    %v1324 = vunpack.c.l.b16 %v1229
    %v1325 = vunpack.c.h.b16 %v1229
    %v1326 = vunpack.c.l.b16 %v1230
    %v1327 = vunpack.c.h.b16 %v1230
    %v1328 = vunpack.c.l.b16 %v1231
    %v1329 = vunpack.c.h.b16 %v1231
    %v1330 = vunpack.c.l.b16 %v1232
    %v1331 = vunpack.c.h.b16 %v1232
    %v1332 = vunpack.c.l.b16 %v1233
    %v1333 = vunpack.c.h.b16 %v1233
    %v1334 = vunpack.c.l.b16 %v1234
    %v1335 = vunpack.c.h.b16 %v1234
    %v1336 = vunpack.c.l.b16 %v1235
    %v1337 = vunpack.c.h.b16 %v1235
    %v1338 = vunpack.c.l.b16 %v1236
    %v1339 = vunpack.c.h.b16 %v1236
    %v1340 = vunpack.c.l.b16 %v1237
    %v1341 = vunpack.c.h.b16 %v1237
    %v1342 = vunpack.c.l.b16 %v1238
    %v1343 = vunpack.c.h.b16 %v1238
    %v1344 = vunpack.c.l.b16 %v1239
    %v1345 = vunpack.c.h.b16 %v1239
    %v1346 = vunpack.c.l.b16 %v1240
    %v1347 = vunpack.c.h.b16 %v1240
    %v1348 = vunpack.c.l.b16 %v1241
    %v1349 = vunpack.c.h.b16 %v1241
    %v1350 = vpack.c.b16 %v1288, %v1286
    %v1351 = vpack.c.b16 %v1289, %v1287
    %v1352 = vpack.c.b16 %v1292, %v1290
    %v1353 = vpack.c.b16 %v1293, %v1291
    %v1354 = vpack.c.b16 %v1296, %v1294
    %v1355 = vpack.c.b16 %v1297, %v1295
    %v1356 = vpack.c.b16 %v1300, %v1298
    %v1357 = vpack.c.b16 %v1301, %v1299
    %v1358 = vpack.c.b16 %v1304, %v1302
    %v1359 = vpack.c.b16 %v1305, %v1303
    %v1360 = vpack.c.b16 %v1308, %v1306
    %v1361 = vpack.c.b16 %v1309, %v1307
    %v1362 = vpack.c.b16 %v1312, %v1310
    %v1363 = vpack.c.b16 %v1313, %v1311
    %v1364 = vpack.c.b16 %v1316, %v1314
    %v1365 = vpack.c.b16 %v1317, %v1315
    %v1366 = vpack.c.b16 %v1320, %v1318
    %v1367 = vpack.c.b16 %v1321, %v1319
    %v1368 = vpack.c.b16 %v1324, %v1322
    %v1369 = vpack.c.b16 %v1325, %v1323
    %v1370 = vpack.c.b16 %v1328, %v1326
    %v1371 = vpack.c.b16 %v1329, %v1327
    %v1372 = vpack.c.b16 %v1332, %v1330
    %v1373 = vpack.c.b16 %v1333, %v1331
    %v1374 = vpack.c.b16 %v1336, %v1334
    %v1375 = vpack.c.b16 %v1337, %v1335
    %v1376 = vpack.c.b16 %v1340, %v1338
    %v1377 = vpack.c.b16 %v1341, %v1339
    %v1378 = vpack.c.b16 %v1344, %v1342
    %v1379 = vpack.c.b16 %v1345, %v1343
    %v1380 = vpack.c.b16 %v1348, %v1346
    %v1381 = vpack.c.b16 %v1349, %v1347
    %1414 = vmatprep.subr.bf16.mxu0 %v1351
    %1415 = vmatpush1.bf16.msra.mxu0 %v1350
    %1416 = vmatprep.subr.bf16.mxu0 %v1353
    %1417 = vmatpush1.bf16.msra.mxu0 %v1352
    %1418 = vmatprep.subr.bf16.mxu0 %v1355
    %1419 = vmatpush1.bf16.msra.mxu0 %v1354
    %1420 = vmatprep.subr.bf16.mxu0 %v1357
    %1421 = vmatpush1.bf16.msra.mxu0 %v1356
    %1422 = vmatprep.subr.bf16.mxu0 %v1359
    %1423 = vmatpush1.bf16.msra.mxu0 %v1358
    %1424 = vmatprep.subr.bf16.mxu0 %v1361
    %1425 = vmatpush1.bf16.msra.mxu0 %v1360
    %1426 = vmatprep.subr.bf16.mxu0 %v1363
    %1427 = vmatpush1.bf16.msra.mxu0 %v1362
    %1428 = vmatprep.subr.bf16.mxu0 %v1365
    %1429 = vmatpush1.bf16.msra.mxu0 %v1364
    %1430 = vmatprep.subr.bf16.mxu0 %v1367
    %1431 = vmatpush1.bf16.msra.mxu0 %v1366
    %1432 = vmatprep.subr.bf16.mxu0 %v1369
    %1433 = vmatpush1.bf16.msra.mxu0 %v1368
    %1434 = vmatprep.subr.bf16.mxu0 %v1371
    %1435 = vmatpush1.bf16.msra.mxu0 %v1370
    %1436 = vmatprep.subr.bf16.mxu0 %v1373
    %1437 = vmatpush1.bf16.msra.mxu0 %v1372
    %1438 = vmatprep.subr.bf16.mxu0 %v1375
    %1439 = vmatpush1.bf16.msra.mxu0 %v1374
    %1440 = vmatprep.subr.bf16.mxu0 %v1377
    %1441 = vmatpush1.bf16.msra.mxu0 %v1376
    %1442 = vmatprep.subr.bf16.mxu0 %v1379
    %1443 = vmatpush1.bf16.msra.mxu0 %v1378
    %1444 = vmatprep.subr.bf16.mxu0 %v1381
    %1445 = vmatpush1.bf16.msra.mxu0 %v1380
    %1446 = vmatprep.mubr.bf16.mxu0 %v1209
    %1447 = vmatmul.mubr.bf16.gmra.mrb[0].mxu0 %v1208
    %v1448 = vpop.f32.mrb[0].mxu0
    %v1449 = vadd.f32 %v1247, %v1448
    %v1450 = vpop.f32.mrb[0].mxu0
    %v1451 = vadd.f32 %v1251, %v1450
    %v1452 = vpop.f32.mrb[0].mxu0
    %v1453 = vpop.f32.mrb[0].mxu0
    %1454 = vdwg.mxu0
    %v1455 = vmul.f32 %v1451, 0.5
    %v1456 = vmul.f32 %v1455, 1.442695
    %v1457 = vpow.pop %v1456
    %v1458 = vld [vmem:[#allocation5] sm:$0xff]
    %v1459 = vmul.f32 %v1458, %v1457
    %v1460 = vadd.f32 %v1449, %v1459
    %v1461 = vpack.c.bf16 %v1460, %v1460
    %v1462 = vld [vmem:[#allocation16] sm:$0xff]
    %v1463 = vld [vmem:[#allocation16 + $0x8] sm:$0xff]
    %v1464 = vld [vmem:[#allocation16 + $0x10] sm:$0xff]
    %v1465 = vld [vmem:[#allocation16 + $0x18] sm:$0xff]
    %v1466 = vld [vmem:[#allocation16 + $0x20] sm:$0xff]
    %v1467 = vld [vmem:[#allocation16 + $0x28] sm:$0xff]
    %v1468 = vld [vmem:[#allocation16 + $0x30] sm:$0xff]
    %v1469 = vld [vmem:[#allocation16 + $0x38] sm:$0xff]
    %v1470 = vld [vmem:[#allocation16 + $0x40] sm:$0xff]
    %v1471 = vld [vmem:[#allocation16 + $0x48] sm:$0xff]
    %v1472 = vld [vmem:[#allocation16 + $0x50] sm:$0xff]
    %v1473 = vld [vmem:[#allocation16 + $0x58] sm:$0xff]
    %v1474 = vld [vmem:[#allocation16 + $0x60] sm:$0xff]
    %v1475 = vld [vmem:[#allocation16 + $0x68] sm:$0xff]
    %v1476 = vld [vmem:[#allocation16 + $0x70] sm:$0xff]
    %v1477 = vld [vmem:[#allocation16 + $0x78] sm:$0xff]
    %v1478 = vld [vmem:[#allocation17] sm:$0x3]
    %v1480 = vlaneseq
    %v1481 = vshrl.u32 %v1480, 7
    %v1482 = vsub.s32 0, %v1481
    %v1483 = vrot.slane %v1478, %v1482
    %v1484 = vlaneseq
    %v1485 = vshrl.u32 %v1484, 7
    %v1486 = vsub.s32 1, %v1485
    %v1487 = vrot.slane %v1478, %v1486
    %v1506 = vunpack.c.l.b16 %v1462
    %v1507 = vunpack.c.h.b16 %v1462
    %v1508 = vunpack.c.l.b16 %v1463
    %v1509 = vunpack.c.h.b16 %v1463
    %v1510 = vunpack.c.l.b16 %v1464
    %v1511 = vunpack.c.h.b16 %v1464
    %v1512 = vunpack.c.l.b16 %v1465
    %v1513 = vunpack.c.h.b16 %v1465
    %v1514 = vunpack.c.l.b16 %v1466
    %v1515 = vunpack.c.h.b16 %v1466
    %v1516 = vunpack.c.l.b16 %v1467
    %v1517 = vunpack.c.h.b16 %v1467
    %v1518 = vunpack.c.l.b16 %v1468
    %v1519 = vunpack.c.h.b16 %v1468
    %v1520 = vunpack.c.l.b16 %v1469
    %v1521 = vunpack.c.h.b16 %v1469
    %v1522 = vunpack.c.l.b16 %v1470
    %v1523 = vunpack.c.h.b16 %v1470
    %v1524 = vunpack.c.l.b16 %v1471
    %v1525 = vunpack.c.h.b16 %v1471
    %v1526 = vunpack.c.l.b16 %v1472
    %v1527 = vunpack.c.h.b16 %v1472
    %v1528 = vunpack.c.l.b16 %v1473
    %v1529 = vunpack.c.h.b16 %v1473
    %v1530 = vunpack.c.l.b16 %v1474
    %v1531 = vunpack.c.h.b16 %v1474
    %v1532 = vunpack.c.l.b16 %v1475
    %v1533 = vunpack.c.h.b16 %v1475
    %v1534 = vunpack.c.l.b16 %v1476
    %v1535 = vunpack.c.h.b16 %v1476
    %v1536 = vunpack.c.l.b16 %v1477
    %v1537 = vunpack.c.h.b16 %v1477
    %v1538 = vpack.c.b16 %v1508, %v1506
    %v1539 = vpack.c.b16 %v1509, %v1507
    %v1540 = vpack.c.b16 %v1512, %v1510
    %v1541 = vpack.c.b16 %v1513, %v1511
    %v1542 = vpack.c.b16 %v1516, %v1514
    %v1543 = vpack.c.b16 %v1517, %v1515
    %v1544 = vpack.c.b16 %v1520, %v1518
    %v1545 = vpack.c.b16 %v1521, %v1519
    %v1546 = vpack.c.b16 %v1524, %v1522
    %v1547 = vpack.c.b16 %v1525, %v1523
    %v1548 = vpack.c.b16 %v1528, %v1526
    %v1549 = vpack.c.b16 %v1529, %v1527
    %v1550 = vpack.c.b16 %v1532, %v1530
    %v1551 = vpack.c.b16 %v1533, %v1531
    %v1552 = vpack.c.b16 %v1536, %v1534
    %v1553 = vpack.c.b16 %v1537, %v1535
    %1570 = vmatprep.subr.bf16.mxu0 %v1539
    %1571 = vmatpush1.bf16.msra.mxu0 %v1538
    %1572 = vmatprep.subr.bf16.mxu0 %v1541
    %1573 = vmatpush1.bf16.msra.mxu0 %v1540
    %1574 = vmatprep.subr.bf16.mxu0 %v1543
    %1575 = vmatpush1.bf16.msra.mxu0 %v1542
    %1576 = vmatprep.subr.bf16.mxu0 %v1545
    %1577 = vmatpush1.bf16.msra.mxu0 %v1544
    %1578 = vmatprep.subr.bf16.mxu0 %v1547
    %1579 = vmatpush1.bf16.msra.mxu0 %v1546
    %1580 = vmatprep.subr.bf16.mxu0 %v1549
    %1581 = vmatpush1.bf16.msra.mxu0 %v1548
    %1582 = vmatprep.subr.bf16.mxu0 %v1551
    %1583 = vmatpush1.bf16.msra.mxu0 %v1550
    %1584 = vmatprep.subr.bf16.mxu0 %v1553
    %1585 = vmatpush1.bf16.msra.mxu0 %v1552
    %1586 = vmatprep.subr.bf16.mxu0 0
    %1587 = vmatpush1.bf16.msra.mxu0 0
    %1588 = vmatprep.subr.bf16.mxu0 0
    %1589 = vmatpush1.bf16.msra.mxu0 0
    %1590 = vmatprep.subr.bf16.mxu0 0
    %1591 = vmatpush1.bf16.msra.mxu0 0
    %1592 = vmatprep.subr.bf16.mxu0 0
    %1593 = vmatpush1.bf16.msra.mxu0 0
    %1594 = vmatprep.subr.bf16.mxu0 0
    %1595 = vmatpush1.bf16.msra.mxu0 0
    %1596 = vmatprep.subr.bf16.mxu0 0
    %1597 = vmatpush1.bf16.msra.mxu0 0
    %1598 = vmatprep.subr.bf16.mxu0 0
    %1599 = vmatpush1.bf16.msra.mxu0 0
    %1600 = vmatprep.subr.bf16.mxu0 0
    %1601 = vmatpush1.bf16.msra.mxu0 0
    %1602 = vmatprep.mubr.bf16.mxu0 0
    %1603 = vmatmul.mubr.bf16.gmra.mrb[0].mxu0 %v1461
    %v1604 = vpop.f32.mrb[0].mxu0
    %v1605 = vadd.f32 %v1483, %v1604
    %v1606 = vpop.f32.mrb[0].mxu0
    %v1607 = vadd.f32 %v1487, %v1606
    %v1608 = vpop.f32.mrb[0].mxu0
    %v1609 = vpop.f32.mrb[0].mxu0
    %1610 = vdwg.mxu0
    %vm1611 = vcmp.ge.f32.partialorder %v1605, 0.0
    %vm1612 = vcmp.ge.f32.partialorder %v1607, 0.0
    %v1613 = vmul.f32 %v1605, 0.01
    %v1614 = vmul.f32 %v1607, 0.01
    %v1615 = vsel %vm1611, %v1605, %v1613
    %v1616 = vsel %vm1612, %v1607, %v1614
    %v1617 = vpack.c.bf16 %v1615, %v1615
    %v1618 = vpack.c.bf16 %v1616, %v1616
    %v1619 = vld [vmem:[#allocation19] sm:$0xff]
    %v1620 = vld [vmem:[#allocation19 + $0x8] sm:$0xff]
    %v1621 = vld [vmem:[#allocation19 + $0x10] sm:$0xff]
    %v1622 = vld [vmem:[#allocation19 + $0x18] sm:$0xff]
    %v1623 = vld [vmem:[#allocation19 + $0x20] sm:$0xff]
    %v1624 = vld [vmem:[#allocation19 + $0x28] sm:$0xff]
    %v1625 = vld [vmem:[#allocation19 + $0x30] sm:$0xff]
    %v1626 = vld [vmem:[#allocation19 + $0x38] sm:$0xff]
    %v1627 = vld [vmem:[#allocation19 + $0x40] sm:$0xff]
    %v1628 = vld [vmem:[#allocation19 + $0x48] sm:$0xff]
    %v1629 = vld [vmem:[#allocation19 + $0x50] sm:$0xff]
    %v1630 = vld [vmem:[#allocation19 + $0x58] sm:$0xff]
    %v1631 = vld [vmem:[#allocation19 + $0x60] sm:$0xff]
    %v1632 = vld [vmem:[#allocation19 + $0x68] sm:$0xff]
    %v1633 = vld [vmem:[#allocation19 + $0x70] sm:$0xff]
    %v1634 = vld [vmem:[#allocation19 + $0x78] sm:$0xff]
    %v1635 = vld [vmem:[#allocation19 + $0x80] sm:$0xff]
    %v1636 = vld [vmem:[#allocation19 + $0x88] sm:$0xff]
    %v1637 = vld [vmem:[#allocation19 + $0x90] sm:$0xff]
    %v1638 = vld [vmem:[#allocation19 + $0x98] sm:$0xff]
    %v1639 = vld [vmem:[#allocation19 + $0xa0] sm:$0xff]
    %v1640 = vld [vmem:[#allocation19 + $0xa8] sm:$0xff]
    %v1641 = vld [vmem:[#allocation19 + $0xb0] sm:$0xff]
    %v1642 = vld [vmem:[#allocation19 + $0xb8] sm:$0xff]
    %v1643 = vld [vmem:[#allocation19 + $0xc0] sm:$0xff]
    %v1644 = vld [vmem:[#allocation19 + $0xc8] sm:$0xff]
    %v1645 = vld [vmem:[#allocation19 + $0xd0] sm:$0xff]
    %v1646 = vld [vmem:[#allocation19 + $0xd8] sm:$0xff]
    %v1647 = vld [vmem:[#allocation19 + $0xe0] sm:$0xff]
    %v1648 = vld [vmem:[#allocation19 + $0xe8] sm:$0xff]
    %v1649 = vld [vmem:[#allocation19 + $0xf0] sm:$0xff]
    %v1650 = vld [vmem:[#allocation19 + $0xf8] sm:$0xff]
    %v1651 = vld [vmem:[#allocation20] sm:$0x3]
    %v1653 = vlaneseq
    %v1654 = vshrl.u32 %v1653, 7
    %v1655 = vsub.s32 0, %v1654
    %v1656 = vrot.slane %v1651, %v1655
    %v1657 = vlaneseq
    %v1658 = vshrl.u32 %v1657, 7
    %v1659 = vsub.s32 1, %v1658
    %v1660 = vrot.slane %v1651, %v1659
    %v1695 = vunpack.c.l.b16 %v1619
    %v1696 = vunpack.c.h.b16 %v1619
    %v1697 = vunpack.c.l.b16 %v1620
    %v1698 = vunpack.c.h.b16 %v1620
    %v1699 = vunpack.c.l.b16 %v1621
    %v1700 = vunpack.c.h.b16 %v1621
    %v1701 = vunpack.c.l.b16 %v1622
    %v1702 = vunpack.c.h.b16 %v1622
    %v1703 = vunpack.c.l.b16 %v1623
    %v1704 = vunpack.c.h.b16 %v1623
    %v1705 = vunpack.c.l.b16 %v1624
    %v1706 = vunpack.c.h.b16 %v1624
    %v1707 = vunpack.c.l.b16 %v1625
    %v1708 = vunpack.c.h.b16 %v1625
    %v1709 = vunpack.c.l.b16 %v1626
    %v1710 = vunpack.c.h.b16 %v1626
    %v1711 = vunpack.c.l.b16 %v1627
    %v1712 = vunpack.c.h.b16 %v1627
    %v1713 = vunpack.c.l.b16 %v1628
    %v1714 = vunpack.c.h.b16 %v1628
    %v1715 = vunpack.c.l.b16 %v1629
    %v1716 = vunpack.c.h.b16 %v1629
    %v1717 = vunpack.c.l.b16 %v1630
    %v1718 = vunpack.c.h.b16 %v1630
    %v1719 = vunpack.c.l.b16 %v1631
    %v1720 = vunpack.c.h.b16 %v1631
    %v1721 = vunpack.c.l.b16 %v1632
    %v1722 = vunpack.c.h.b16 %v1632
    %v1723 = vunpack.c.l.b16 %v1633
    %v1724 = vunpack.c.h.b16 %v1633
    %v1725 = vunpack.c.l.b16 %v1634
    %v1726 = vunpack.c.h.b16 %v1634
    %v1727 = vunpack.c.l.b16 %v1635
    %v1728 = vunpack.c.h.b16 %v1635
    %v1729 = vunpack.c.l.b16 %v1636
    %v1730 = vunpack.c.h.b16 %v1636
    %v1731 = vunpack.c.l.b16 %v1637
    %v1732 = vunpack.c.h.b16 %v1637
    %v1733 = vunpack.c.l.b16 %v1638
    %v1734 = vunpack.c.h.b16 %v1638
    %v1735 = vunpack.c.l.b16 %v1639
    %v1736 = vunpack.c.h.b16 %v1639
    %v1737 = vunpack.c.l.b16 %v1640
    %v1738 = vunpack.c.h.b16 %v1640
    %v1739 = vunpack.c.l.b16 %v1641
    %v1740 = vunpack.c.h.b16 %v1641
    %v1741 = vunpack.c.l.b16 %v1642
    %v1742 = vunpack.c.h.b16 %v1642
    %v1743 = vunpack.c.l.b16 %v1643
    %v1744 = vunpack.c.h.b16 %v1643
    %v1745 = vunpack.c.l.b16 %v1644
    %v1746 = vunpack.c.h.b16 %v1644
    %v1747 = vunpack.c.l.b16 %v1645
    %v1748 = vunpack.c.h.b16 %v1645
    %v1749 = vunpack.c.l.b16 %v1646
    %v1750 = vunpack.c.h.b16 %v1646
    %v1751 = vunpack.c.l.b16 %v1647
    %v1752 = vunpack.c.h.b16 %v1647
    %v1753 = vunpack.c.l.b16 %v1648
    %v1754 = vunpack.c.h.b16 %v1648
    %v1755 = vunpack.c.l.b16 %v1649
    %v1756 = vunpack.c.h.b16 %v1649
    %v1757 = vunpack.c.l.b16 %v1650
    %v1758 = vunpack.c.h.b16 %v1650
    %v1759 = vpack.c.b16 %v1697, %v1695
    %v1760 = vpack.c.b16 %v1698, %v1696
    %v1761 = vpack.c.b16 %v1701, %v1699
    %v1762 = vpack.c.b16 %v1702, %v1700
    %v1763 = vpack.c.b16 %v1705, %v1703
    %v1764 = vpack.c.b16 %v1706, %v1704
    %v1765 = vpack.c.b16 %v1709, %v1707
    %v1766 = vpack.c.b16 %v1710, %v1708
    %v1767 = vpack.c.b16 %v1713, %v1711
    %v1768 = vpack.c.b16 %v1714, %v1712
    %v1769 = vpack.c.b16 %v1717, %v1715
    %v1770 = vpack.c.b16 %v1718, %v1716
    %v1771 = vpack.c.b16 %v1721, %v1719
    %v1772 = vpack.c.b16 %v1722, %v1720
    %v1773 = vpack.c.b16 %v1725, %v1723
    %v1774 = vpack.c.b16 %v1726, %v1724
    %v1775 = vpack.c.b16 %v1729, %v1727
    %v1776 = vpack.c.b16 %v1730, %v1728
    %v1777 = vpack.c.b16 %v1733, %v1731
    %v1778 = vpack.c.b16 %v1734, %v1732
    %v1779 = vpack.c.b16 %v1737, %v1735
    %v1780 = vpack.c.b16 %v1738, %v1736
    %v1781 = vpack.c.b16 %v1741, %v1739
    %v1782 = vpack.c.b16 %v1742, %v1740
    %v1783 = vpack.c.b16 %v1745, %v1743
    %v1784 = vpack.c.b16 %v1746, %v1744
    %v1785 = vpack.c.b16 %v1749, %v1747
    %v1786 = vpack.c.b16 %v1750, %v1748
    %v1787 = vpack.c.b16 %v1753, %v1751
    %v1788 = vpack.c.b16 %v1754, %v1752
    %v1789 = vpack.c.b16 %v1757, %v1755
    %v1790 = vpack.c.b16 %v1758, %v1756
    %1823 = vmatprep.subr.bf16.mxu0 %v1760
    %1824 = vmatpush1.bf16.msra.mxu0 %v1759
    %1825 = vmatprep.subr.bf16.mxu0 %v1762
    %1826 = vmatpush1.bf16.msra.mxu0 %v1761
    %1827 = vmatprep.subr.bf16.mxu0 %v1764
    %1828 = vmatpush1.bf16.msra.mxu0 %v1763
    %1829 = vmatprep.subr.bf16.mxu0 %v1766
    %1830 = vmatpush1.bf16.msra.mxu0 %v1765
    %1831 = vmatprep.subr.bf16.mxu0 %v1768
    %1832 = vmatpush1.bf16.msra.mxu0 %v1767
    %1833 = vmatprep.subr.bf16.mxu0 %v1770
    %1834 = vmatpush1.bf16.msra.mxu0 %v1769
    %1835 = vmatprep.subr.bf16.mxu0 %v1772
    %1836 = vmatpush1.bf16.msra.mxu0 %v1771
    %1837 = vmatprep.subr.bf16.mxu0 %v1774
    %1838 = vmatpush1.bf16.msra.mxu0 %v1773
    %1839 = vmatprep.subr.bf16.mxu0 %v1776
    %1840 = vmatpush1.bf16.msra.mxu0 %v1775
    %1841 = vmatprep.subr.bf16.mxu0 %v1778
    %1842 = vmatpush1.bf16.msra.mxu0 %v1777
    %1843 = vmatprep.subr.bf16.mxu0 %v1780
    %1844 = vmatpush1.bf16.msra.mxu0 %v1779
    %1845 = vmatprep.subr.bf16.mxu0 %v1782
    %1846 = vmatpush1.bf16.msra.mxu0 %v1781
    %1847 = vmatprep.subr.bf16.mxu0 %v1784
    %1848 = vmatpush1.bf16.msra.mxu0 %v1783
    %1849 = vmatprep.subr.bf16.mxu0 %v1786
    %1850 = vmatpush1.bf16.msra.mxu0 %v1785
    %1851 = vmatprep.subr.bf16.mxu0 %v1788
    %1852 = vmatpush1.bf16.msra.mxu0 %v1787
    %1853 = vmatprep.subr.bf16.mxu0 %v1790
    %1854 = vmatpush1.bf16.msra.mxu0 %v1789
    %1855 = vmatprep.mubr.bf16.mxu0 %v1618
    %1856 = vmatmul.mubr.bf16.gmra.mrb[0].mxu0 %v1617
    %v1857 = vpop.f32.mrb[0].mxu0
    %v1858 = vadd.f32 %v1656, %v1857
    %v1859 = vpop.f32.mrb[0].mxu0
    %v1860 = vadd.f32 %v1660, %v1859
    %v1861 = vpop.f32.mrb[0].mxu0
    %v1862 = vpop.f32.mrb[0].mxu0
    %1863 = vdwg.mxu0
    %vm1864 = vcmp.ge.f32.partialorder %v1858, 0.0
    %vm1865 = vcmp.ge.f32.partialorder %v1860, 0.0
    %v1866 = vmul.f32 %v1858, 0.01
    %v1867 = vmul.f32 %v1860, 0.01
    %v1868 = vsel %vm1864, %v1858, %v1866
    %v1869 = vsel %vm1865, %v1860, %v1867
    %v1870 = vpack.c.bf16 %v1868, %v1868
    %v1871 = vpack.c.bf16 %v1869, %v1869
    %v1872 = vld [vmem:[#allocation22] sm:$0xff]
    %v1873 = vld [vmem:[#allocation22 + $0x8] sm:$0xff]
    %v1874 = vld [vmem:[#allocation22 + $0x10] sm:$0xff]
    %v1875 = vld [vmem:[#allocation22 + $0x18] sm:$0xff]
    %v1876 = vld [vmem:[#allocation22 + $0x20] sm:$0xff]
    %v1877 = vld [vmem:[#allocation22 + $0x28] sm:$0xff]
    %v1878 = vld [vmem:[#allocation22 + $0x30] sm:$0xff]
    %v1879 = vld [vmem:[#allocation22 + $0x38] sm:$0xff]
    %v1880 = vld [vmem:[#allocation22 + $0x40] sm:$0xff]
    %v1881 = vld [vmem:[#allocation22 + $0x48] sm:$0xff]
    %v1882 = vld [vmem:[#allocation22 + $0x50] sm:$0xff]
    %v1883 = vld [vmem:[#allocation22 + $0x58] sm:$0xff]
    %v1884 = vld [vmem:[#allocation22 + $0x60] sm:$0xff]
    %v1885 = vld [vmem:[#allocation22 + $0x68] sm:$0xff]
    %v1886 = vld [vmem:[#allocation22 + $0x70] sm:$0xff]
    %v1887 = vld [vmem:[#allocation22 + $0x78] sm:$0xff]
    %v1888 = vld [vmem:[#allocation22 + $0x80] sm:$0xff]
    %v1889 = vld [vmem:[#allocation22 + $0x88] sm:$0xff]
    %v1890 = vld [vmem:[#allocation22 + $0x90] sm:$0xff]
    %v1891 = vld [vmem:[#allocation22 + $0x98] sm:$0xff]
    %v1892 = vld [vmem:[#allocation22 + $0xa0] sm:$0xff]
    %v1893 = vld [vmem:[#allocation22 + $0xa8] sm:$0xff]
    %v1894 = vld [vmem:[#allocation22 + $0xb0] sm:$0xff]
    %v1895 = vld [vmem:[#allocation22 + $0xb8] sm:$0xff]
    %v1896 = vld [vmem:[#allocation22 + $0xc0] sm:$0xff]
    %v1897 = vld [vmem:[#allocation22 + $0xc8] sm:$0xff]
    %v1898 = vld [vmem:[#allocation22 + $0xd0] sm:$0xff]
    %v1899 = vld [vmem:[#allocation22 + $0xd8] sm:$0xff]
    %v1900 = vld [vmem:[#allocation22 + $0xe0] sm:$0xff]
    %v1901 = vld [vmem:[#allocation22 + $0xe8] sm:$0xff]
    %v1902 = vld [vmem:[#allocation22 + $0xf0] sm:$0xff]
    %v1903 = vld [vmem:[#allocation22 + $0xf8] sm:$0xff]
    %v1904 = vld [vmem:[#allocation22 + $0x100] sm:$0xff]
    %v1905 = vld [vmem:[#allocation22 + $0x108] sm:$0xff]
    %v1906 = vld [vmem:[#allocation22 + $0x110] sm:$0xff]
    %v1907 = vld [vmem:[#allocation22 + $0x118] sm:$0xff]
    %v1908 = vld [vmem:[#allocation22 + $0x120] sm:$0xff]
    %v1909 = vld [vmem:[#allocation22 + $0x128] sm:$0xff]
    %v1910 = vld [vmem:[#allocation22 + $0x130] sm:$0xff]
    %v1911 = vld [vmem:[#allocation22 + $0x138] sm:$0xff]
    %v1912 = vld [vmem:[#allocation22 + $0x140] sm:$0xff]
    %v1913 = vld [vmem:[#allocation22 + $0x148] sm:$0xff]
    %v1914 = vld [vmem:[#allocation22 + $0x150] sm:$0xff]
    %v1915 = vld [vmem:[#allocation22 + $0x158] sm:$0xff]
    %v1916 = vld [vmem:[#allocation22 + $0x160] sm:$0xff]
    %v1917 = vld [vmem:[#allocation22 + $0x168] sm:$0xff]
    %v1918 = vld [vmem:[#allocation22 + $0x170] sm:$0xff]
    %v1919 = vld [vmem:[#allocation22 + $0x178] sm:$0xff]
    %v1920 = vld [vmem:[#allocation22 + $0x180] sm:$0xff]
    %v1921 = vld [vmem:[#allocation22 + $0x188] sm:$0xff]
    %v1922 = vld [vmem:[#allocation22 + $0x190] sm:$0xff]
    %v1923 = vld [vmem:[#allocation22 + $0x198] sm:$0xff]
    %v1924 = vld [vmem:[#allocation22 + $0x1a0] sm:$0xff]
    %v1925 = vld [vmem:[#allocation22 + $0x1a8] sm:$0xff]
    %v1926 = vld [vmem:[#allocation22 + $0x1b0] sm:$0xff]
    %v1927 = vld [vmem:[#allocation22 + $0x1b8] sm:$0xff]
    %v1928 = vld [vmem:[#allocation22 + $0x1c0] sm:$0xff]
    %v1929 = vld [vmem:[#allocation22 + $0x1c8] sm:$0xff]
    %v1930 = vld [vmem:[#allocation22 + $0x1d0] sm:$0xff]
    %v1931 = vld [vmem:[#allocation22 + $0x1d8] sm:$0xff]
    %v1932 = vld [vmem:[#allocation22 + $0x1e0] sm:$0xff]
    %v1933 = vld [vmem:[#allocation22 + $0x1e8] sm:$0xff]
    %v1934 = vld [vmem:[#allocation22 + $0x1f0] sm:$0xff]
    %v1935 = vld [vmem:[#allocation22 + $0x1f8] sm:$0xff]
    %v1936 = vld [vmem:[#allocation22 + $0x200] sm:$0xff]
    %v1937 = vld [vmem:[#allocation22 + $0x208] sm:$0xff]
    %v1938 = vld [vmem:[#allocation22 + $0x210] sm:$0xff]
    %v1939 = vld [vmem:[#allocation22 + $0x218] sm:$0xff]
    %v1940 = vld [vmem:[#allocation22 + $0x220] sm:$0xff]
    %v1941 = vld [vmem:[#allocation22 + $0x228] sm:$0xff]
    %v1942 = vld [vmem:[#allocation22 + $0x230] sm:$0xff]
    %v1943 = vld [vmem:[#allocation22 + $0x238] sm:$0xff]
    %v1944 = vld [vmem:[#allocation22 + $0x240] sm:$0xff]
    %v1945 = vld [vmem:[#allocation22 + $0x248] sm:$0xff]
    %v1946 = vld [vmem:[#allocation22 + $0x250] sm:$0xff]
    %v1947 = vld [vmem:[#allocation22 + $0x258] sm:$0xff]
    %v1948 = vld [vmem:[#allocation22 + $0x260] sm:$0xff]
    %v1949 = vld [vmem:[#allocation22 + $0x268] sm:$0xff]
    %v1950 = vld [vmem:[#allocation22 + $0x270] sm:$0xff]
    %v1951 = vld [vmem:[#allocation22 + $0x278] sm:$0xff]
    %v1952 = vld [vmem:[#allocation22 + $0x280] sm:$0xff]
    %v1953 = vld [vmem:[#allocation22 + $0x288] sm:$0xff]
    %v1954 = vld [vmem:[#allocation22 + $0x290] sm:$0xff]
    %v1955 = vld [vmem:[#allocation22 + $0x298] sm:$0xff]
    %v1956 = vld [vmem:[#allocation22 + $0x2a0] sm:$0xff]
    %v1957 = vld [vmem:[#allocation22 + $0x2a8] sm:$0xff]
    %v1958 = vld [vmem:[#allocation22 + $0x2b0] sm:$0xff]
    %v1959 = vld [vmem:[#allocation22 + $0x2b8] sm:$0xff]
    %v1960 = vld [vmem:[#allocation22 + $0x2c0] sm:$0xff]
    %v1961 = vld [vmem:[#allocation22 + $0x2c8] sm:$0xff]
    %v1962 = vld [vmem:[#allocation22 + $0x2d0] sm:$0xff]
    %v1963 = vld [vmem:[#allocation22 + $0x2d8] sm:$0xff]
    %v1964 = vld [vmem:[#allocation22 + $0x2e0] sm:$0xff]
    %v1965 = vld [vmem:[#allocation22 + $0x2e8] sm:$0xff]
    %v1966 = vld [vmem:[#allocation22 + $0x2f0] sm:$0xff]
    %v1967 = vld [vmem:[#allocation22 + $0x2f8] sm:$0xff]
    %v1968 = vld [vmem:[#allocation23] sm:$0x3f]
    %v1970 = vlaneseq
    %v1971 = vshrl.u32 %v1970, 7
    %v1972 = vsub.s32 0, %v1971
    %v1973 = vrot.slane %v1968, %v1972
    %v1974 = vlaneseq
    %v1975 = vshrl.u32 %v1974, 7
    %v1976 = vsub.s32 1, %v1975
    %v1977 = vrot.slane %v1968, %v1976
    %v1978 = vlaneseq
    %v1979 = vshrl.u32 %v1978, 7
    %v1980 = vsub.s32 2, %v1979
    %v1981 = vrot.slane %v1968, %v1980
    %v1982 = vlaneseq
    %v1983 = vshrl.u32 %v1982, 7
    %v1984 = vsub.s32 3, %v1983
    %v1985 = vrot.slane %v1968, %v1984
    %v1986 = vlaneseq
    %v1987 = vshrl.u32 %v1986, 7
    %v1988 = vsub.s32 4, %v1987
    %v1989 = vrot.slane %v1968, %v1988
    %v1990 = vlaneseq
    %v1991 = vshrl.u32 %v1990, 7
    %v1992 = vsub.s32 5, %v1991
    %v1993 = vrot.slane %v1968, %v1992
    %v2096 = vunpack.c.l.b16 %v1872
    %v2097 = vunpack.c.h.b16 %v1872
    %v2098 = vunpack.c.l.b16 %v1873
    %v2099 = vunpack.c.h.b16 %v1873
    %v2100 = vunpack.c.l.b16 %v1874
    %v2101 = vunpack.c.h.b16 %v1874
    %v2102 = vunpack.c.l.b16 %v1875
    %v2103 = vunpack.c.h.b16 %v1875
    %v2104 = vunpack.c.l.b16 %v1876
    %v2105 = vunpack.c.h.b16 %v1876
    %v2106 = vunpack.c.l.b16 %v1877
    %v2107 = vunpack.c.h.b16 %v1877
    %v2108 = vunpack.c.l.b16 %v1878
    %v2109 = vunpack.c.h.b16 %v1878
    %v2110 = vunpack.c.l.b16 %v1879
    %v2111 = vunpack.c.h.b16 %v1879
    %v2112 = vunpack.c.l.b16 %v1880
    %v2113 = vunpack.c.h.b16 %v1880
    %v2114 = vunpack.c.l.b16 %v1881
    %v2115 = vunpack.c.h.b16 %v1881
    %v2116 = vunpack.c.l.b16 %v1882
    %v2117 = vunpack.c.h.b16 %v1882
    %v2118 = vunpack.c.l.b16 %v1883
    %v2119 = vunpack.c.h.b16 %v1883
    %v2120 = vunpack.c.l.b16 %v1884
    %v2121 = vunpack.c.h.b16 %v1884
    %v2122 = vunpack.c.l.b16 %v1885
    %v2123 = vunpack.c.h.b16 %v1885
    %v2124 = vunpack.c.l.b16 %v1886
    %v2125 = vunpack.c.h.b16 %v1886
    %v2126 = vunpack.c.l.b16 %v1887
    %v2127 = vunpack.c.h.b16 %v1887
    %v2128 = vunpack.c.l.b16 %v1888
    %v2129 = vunpack.c.h.b16 %v1888
    %v2130 = vunpack.c.l.b16 %v1889
    %v2131 = vunpack.c.h.b16 %v1889
    %v2132 = vunpack.c.l.b16 %v1890
    %v2133 = vunpack.c.h.b16 %v1890
    %v2134 = vunpack.c.l.b16 %v1891
    %v2135 = vunpack.c.h.b16 %v1891
    %v2136 = vunpack.c.l.b16 %v1892
    %v2137 = vunpack.c.h.b16 %v1892
    %v2138 = vunpack.c.l.b16 %v1893
    %v2139 = vunpack.c.h.b16 %v1893
    %v2140 = vunpack.c.l.b16 %v1894
    %v2141 = vunpack.c.h.b16 %v1894
    %v2142 = vunpack.c.l.b16 %v1895
    %v2143 = vunpack.c.h.b16 %v1895
    %v2144 = vunpack.c.l.b16 %v1896
    %v2145 = vunpack.c.h.b16 %v1896
    %v2146 = vunpack.c.l.b16 %v1897
    %v2147 = vunpack.c.h.b16 %v1897
    %v2148 = vunpack.c.l.b16 %v1898
    %v2149 = vunpack.c.h.b16 %v1898
    %v2150 = vunpack.c.l.b16 %v1899
    %v2151 = vunpack.c.h.b16 %v1899
    %v2152 = vunpack.c.l.b16 %v1900
    %v2153 = vunpack.c.h.b16 %v1900
    %v2154 = vunpack.c.l.b16 %v1901
    %v2155 = vunpack.c.h.b16 %v1901
    %v2156 = vunpack.c.l.b16 %v1902
    %v2157 = vunpack.c.h.b16 %v1902
    %v2158 = vunpack.c.l.b16 %v1903
    %v2159 = vunpack.c.h.b16 %v1903
    %v2160 = vunpack.c.l.b16 %v1904
    %v2161 = vunpack.c.h.b16 %v1904
    %v2162 = vunpack.c.l.b16 %v1905
    %v2163 = vunpack.c.h.b16 %v1905
    %v2164 = vunpack.c.l.b16 %v1906
    %v2165 = vunpack.c.h.b16 %v1906
    %v2166 = vunpack.c.l.b16 %v1907
    %v2167 = vunpack.c.h.b16 %v1907
    %v2168 = vunpack.c.l.b16 %v1908
    %v2169 = vunpack.c.h.b16 %v1908
    %v2170 = vunpack.c.l.b16 %v1909
    %v2171 = vunpack.c.h.b16 %v1909
    %v2172 = vunpack.c.l.b16 %v1910
    %v2173 = vunpack.c.h.b16 %v1910
    %v2174 = vunpack.c.l.b16 %v1911
    %v2175 = vunpack.c.h.b16 %v1911
    %v2176 = vunpack.c.l.b16 %v1912
    %v2177 = vunpack.c.h.b16 %v1912
    %v2178 = vunpack.c.l.b16 %v1913
    %v2179 = vunpack.c.h.b16 %v1913
    %v2180 = vunpack.c.l.b16 %v1914
    %v2181 = vunpack.c.h.b16 %v1914
    %v2182 = vunpack.c.l.b16 %v1915
    %v2183 = vunpack.c.h.b16 %v1915
    %v2184 = vunpack.c.l.b16 %v1916
    %v2185 = vunpack.c.h.b16 %v1916
    %v2186 = vunpack.c.l.b16 %v1917
    %v2187 = vunpack.c.h.b16 %v1917
    %v2188 = vunpack.c.l.b16 %v1918
    %v2189 = vunpack.c.h.b16 %v1918
    %v2190 = vunpack.c.l.b16 %v1919
    %v2191 = vunpack.c.h.b16 %v1919
    %v2192 = vunpack.c.l.b16 %v1920
    %v2193 = vunpack.c.h.b16 %v1920
    %v2194 = vunpack.c.l.b16 %v1921
    %v2195 = vunpack.c.h.b16 %v1921
    %v2196 = vunpack.c.l.b16 %v1922
    %v2197 = vunpack.c.h.b16 %v1922
    %v2198 = vunpack.c.l.b16 %v1923
    %v2199 = vunpack.c.h.b16 %v1923
    %v2200 = vunpack.c.l.b16 %v1924
    %v2201 = vunpack.c.h.b16 %v1924
    %v2202 = vunpack.c.l.b16 %v1925
    %v2203 = vunpack.c.h.b16 %v1925
    %v2204 = vunpack.c.l.b16 %v1926
    %v2205 = vunpack.c.h.b16 %v1926
    %v2206 = vunpack.c.l.b16 %v1927
    %v2207 = vunpack.c.h.b16 %v1927
    %v2208 = vunpack.c.l.b16 %v1928
    %v2209 = vunpack.c.h.b16 %v1928
    %v2210 = vunpack.c.l.b16 %v1929
    %v2211 = vunpack.c.h.b16 %v1929
    %v2212 = vunpack.c.l.b16 %v1930
    %v2213 = vunpack.c.h.b16 %v1930
    %v2214 = vunpack.c.l.b16 %v1931
    %v2215 = vunpack.c.h.b16 %v1931
    %v2216 = vunpack.c.l.b16 %v1932
    %v2217 = vunpack.c.h.b16 %v1932
    %v2218 = vunpack.c.l.b16 %v1933
    %v2219 = vunpack.c.h.b16 %v1933
    %v2220 = vunpack.c.l.b16 %v1934
    %v2221 = vunpack.c.h.b16 %v1934
    %v2222 = vunpack.c.l.b16 %v1935
    %v2223 = vunpack.c.h.b16 %v1935
    %v2224 = vunpack.c.l.b16 %v1936
    %v2225 = vunpack.c.h.b16 %v1936
    %v2226 = vunpack.c.l.b16 %v1937
    %v2227 = vunpack.c.h.b16 %v1937
    %v2228 = vunpack.c.l.b16 %v1938
    %v2229 = vunpack.c.h.b16 %v1938
    %v2230 = vunpack.c.l.b16 %v1939
    %v2231 = vunpack.c.h.b16 %v1939
    %v2232 = vunpack.c.l.b16 %v1940
    %v2233 = vunpack.c.h.b16 %v1940
    %v2234 = vunpack.c.l.b16 %v1941
    %v2235 = vunpack.c.h.b16 %v1941
    %v2236 = vunpack.c.l.b16 %v1942
    %v2237 = vunpack.c.h.b16 %v1942
    %v2238 = vunpack.c.l.b16 %v1943
    %v2239 = vunpack.c.h.b16 %v1943
    %v2240 = vunpack.c.l.b16 %v1944
    %v2241 = vunpack.c.h.b16 %v1944
    %v2242 = vunpack.c.l.b16 %v1945
    %v2243 = vunpack.c.h.b16 %v1945
    %v2244 = vunpack.c.l.b16 %v1946
    %v2245 = vunpack.c.h.b16 %v1946
    %v2246 = vunpack.c.l.b16 %v1947
    %v2247 = vunpack.c.h.b16 %v1947
    %v2248 = vunpack.c.l.b16 %v1948
    %v2249 = vunpack.c.h.b16 %v1948
    %v2250 = vunpack.c.l.b16 %v1949
    %v2251 = vunpack.c.h.b16 %v1949
    %v2252 = vunpack.c.l.b16 %v1950
    %v2253 = vunpack.c.h.b16 %v1950
    %v2254 = vunpack.c.l.b16 %v1951
    %v2255 = vunpack.c.h.b16 %v1951
    %v2256 = vunpack.c.l.b16 %v1952
    %v2257 = vunpack.c.h.b16 %v1952
    %v2258 = vunpack.c.l.b16 %v1953
    %v2259 = vunpack.c.h.b16 %v1953
    %v2260 = vunpack.c.l.b16 %v1954
    %v2261 = vunpack.c.h.b16 %v1954
    %v2262 = vunpack.c.l.b16 %v1955
    %v2263 = vunpack.c.h.b16 %v1955
    %v2264 = vunpack.c.l.b16 %v1956
    %v2265 = vunpack.c.h.b16 %v1956
    %v2266 = vunpack.c.l.b16 %v1957
    %v2267 = vunpack.c.h.b16 %v1957
    %v2268 = vunpack.c.l.b16 %v1958
    %v2269 = vunpack.c.h.b16 %v1958
    %v2270 = vunpack.c.l.b16 %v1959
    %v2271 = vunpack.c.h.b16 %v1959
    %v2272 = vunpack.c.l.b16 %v1960
    %v2273 = vunpack.c.h.b16 %v1960
    %v2274 = vunpack.c.l.b16 %v1961
    %v2275 = vunpack.c.h.b16 %v1961
    %v2276 = vunpack.c.l.b16 %v1962
    %v2277 = vunpack.c.h.b16 %v1962
    %v2278 = vunpack.c.l.b16 %v1963
    %v2279 = vunpack.c.h.b16 %v1963
    %v2280 = vunpack.c.l.b16 %v1964
    %v2281 = vunpack.c.h.b16 %v1964
    %v2282 = vunpack.c.l.b16 %v1965
    %v2283 = vunpack.c.h.b16 %v1965
    %v2284 = vunpack.c.l.b16 %v1966
    %v2285 = vunpack.c.h.b16 %v1966
    %v2286 = vunpack.c.l.b16 %v1967
    %v2287 = vunpack.c.h.b16 %v1967
    %v2288 = vpack.c.b16 %v2102, %v2096
    %v2289 = vpack.c.b16 %v2103, %v2097
    %v2290 = vpack.c.b16 %v2104, %v2098
    %v2291 = vpack.c.b16 %v2105, %v2099
    %v2292 = vpack.c.b16 %v2106, %v2100
    %v2293 = vpack.c.b16 %v2107, %v2101
    %v2294 = vpack.c.b16 %v2114, %v2108
    %v2295 = vpack.c.b16 %v2115, %v2109
    %v2296 = vpack.c.b16 %v2116, %v2110
    %v2297 = vpack.c.b16 %v2117, %v2111
    %v2298 = vpack.c.b16 %v2118, %v2112
    %v2299 = vpack.c.b16 %v2119, %v2113
    %v2300 = vpack.c.b16 %v2126, %v2120
    %v2301 = vpack.c.b16 %v2127, %v2121
    %v2302 = vpack.c.b16 %v2128, %v2122
    %v2303 = vpack.c.b16 %v2129, %v2123
    %v2304 = vpack.c.b16 %v2130, %v2124
    %v2305 = vpack.c.b16 %v2131, %v2125
    %v2306 = vpack.c.b16 %v2138, %v2132
    %v2307 = vpack.c.b16 %v2139, %v2133
    %v2308 = vpack.c.b16 %v2140, %v2134
    %v2309 = vpack.c.b16 %v2141, %v2135
    %v2310 = vpack.c.b16 %v2142, %v2136
    %v2311 = vpack.c.b16 %v2143, %v2137
    %v2312 = vpack.c.b16 %v2150, %v2144
    %v2313 = vpack.c.b16 %v2151, %v2145
    %v2314 = vpack.c.b16 %v2152, %v2146
    %v2315 = vpack.c.b16 %v2153, %v2147
    %v2316 = vpack.c.b16 %v2154, %v2148
    %v2317 = vpack.c.b16 %v2155, %v2149
    %v2318 = vpack.c.b16 %v2162, %v2156
    %v2319 = vpack.c.b16 %v2163, %v2157
    %v2320 = vpack.c.b16 %v2164, %v2158
    %v2321 = vpack.c.b16 %v2165, %v2159
    %v2322 = vpack.c.b16 %v2166, %v2160
    %v2323 = vpack.c.b16 %v2167, %v2161
    %v2324 = vpack.c.b16 %v2174, %v2168
    %v2325 = vpack.c.b16 %v2175, %v2169
    %v2326 = vpack.c.b16 %v2176, %v2170
    %v2327 = vpack.c.b16 %v2177, %v2171
    %v2328 = vpack.c.b16 %v2178, %v2172
    %v2329 = vpack.c.b16 %v2179, %v2173
    %v2330 = vpack.c.b16 %v2186, %v2180
    %v2331 = vpack.c.b16 %v2187, %v2181
    %v2332 = vpack.c.b16 %v2188, %v2182
    %v2333 = vpack.c.b16 %v2189, %v2183
    %v2334 = vpack.c.b16 %v2190, %v2184
    %v2335 = vpack.c.b16 %v2191, %v2185
    %v2336 = vpack.c.b16 %v2198, %v2192
    %v2337 = vpack.c.b16 %v2199, %v2193
    %v2338 = vpack.c.b16 %v2200, %v2194
    %v2339 = vpack.c.b16 %v2201, %v2195
    %v2340 = vpack.c.b16 %v2202, %v2196
    %v2341 = vpack.c.b16 %v2203, %v2197
    %v2342 = vpack.c.b16 %v2210, %v2204
    %v2343 = vpack.c.b16 %v2211, %v2205
    %v2344 = vpack.c.b16 %v2212, %v2206
    %v2345 = vpack.c.b16 %v2213, %v2207
    %v2346 = vpack.c.b16 %v2214, %v2208
    %v2347 = vpack.c.b16 %v2215, %v2209
    %v2348 = vpack.c.b16 %v2222, %v2216
    %v2349 = vpack.c.b16 %v2223, %v2217
    %v2350 = vpack.c.b16 %v2224, %v2218
    %v2351 = vpack.c.b16 %v2225, %v2219
    %v2352 = vpack.c.b16 %v2226, %v2220
    %v2353 = vpack.c.b16 %v2227, %v2221
    %v2354 = vpack.c.b16 %v2234, %v2228
    %v2355 = vpack.c.b16 %v2235, %v2229
    %v2356 = vpack.c.b16 %v2236, %v2230
    %v2357 = vpack.c.b16 %v2237, %v2231
    %v2358 = vpack.c.b16 %v2238, %v2232
    %v2359 = vpack.c.b16 %v2239, %v2233
    %v2360 = vpack.c.b16 %v2246, %v2240
    %v2361 = vpack.c.b16 %v2247, %v2241
    %v2362 = vpack.c.b16 %v2248, %v2242
    %v2363 = vpack.c.b16 %v2249, %v2243
    %v2364 = vpack.c.b16 %v2250, %v2244
    %v2365 = vpack.c.b16 %v2251, %v2245
    %v2366 = vpack.c.b16 %v2258, %v2252
    %v2367 = vpack.c.b16 %v2259, %v2253
    %v2368 = vpack.c.b16 %v2260, %v2254
    %v2369 = vpack.c.b16 %v2261, %v2255
    %v2370 = vpack.c.b16 %v2262, %v2256
    %v2371 = vpack.c.b16 %v2263, %v2257
    %v2372 = vpack.c.b16 %v2270, %v2264
    %v2373 = vpack.c.b16 %v2271, %v2265
    %v2374 = vpack.c.b16 %v2272, %v2266
    %v2375 = vpack.c.b16 %v2273, %v2267
    %v2376 = vpack.c.b16 %v2274, %v2268
    %v2377 = vpack.c.b16 %v2275, %v2269
    %v2378 = vpack.c.b16 %v2282, %v2276
    %v2379 = vpack.c.b16 %v2283, %v2277
    %v2380 = vpack.c.b16 %v2284, %v2278
    %v2381 = vpack.c.b16 %v2285, %v2279
    %v2382 = vpack.c.b16 %v2286, %v2280
    %v2383 = vpack.c.b16 %v2287, %v2281
    %2480 = vmatprep.subr.bf16.mxu0 %v2289
    %2481 = vmatpush1.bf16.msra.mxu0 %v2288
    %2482 = vmatprep.subr.bf16.mxu0 %v2295
    %2483 = vmatpush1.bf16.msra.mxu0 %v2294
    %2484 = vmatprep.subr.bf16.mxu0 %v2301
    %2485 = vmatpush1.bf16.msra.mxu0 %v2300
    %2486 = vmatprep.subr.bf16.mxu0 %v2307
    %2487 = vmatpush1.bf16.msra.mxu0 %v2306
    %2488 = vmatprep.subr.bf16.mxu0 %v2313
    %2489 = vmatpush1.bf16.msra.mxu0 %v2312
    %2490 = vmatprep.subr.bf16.mxu0 %v2319
    %2491 = vmatpush1.bf16.msra.mxu0 %v2318
    %2492 = vmatprep.subr.bf16.mxu0 %v2325
    %2493 = vmatpush1.bf16.msra.mxu0 %v2324
    %2494 = vmatprep.subr.bf16.mxu0 %v2331
    %2495 = vmatpush1.bf16.msra.mxu0 %v2330
    %2496 = vmatprep.subr.bf16.mxu0 %v2337
    %2497 = vmatpush1.bf16.msra.mxu0 %v2336
    %2498 = vmatprep.subr.bf16.mxu0 %v2343
    %2499 = vmatpush1.bf16.msra.mxu0 %v2342
    %2500 = vmatprep.subr.bf16.mxu0 %v2349
    %2501 = vmatpush1.bf16.msra.mxu0 %v2348
    %2502 = vmatprep.subr.bf16.mxu0 %v2355
    %2503 = vmatpush1.bf16.msra.mxu0 %v2354
    %2504 = vmatprep.subr.bf16.mxu0 %v2361
    %2505 = vmatpush1.bf16.msra.mxu0 %v2360
    %2506 = vmatprep.subr.bf16.mxu0 %v2367
    %2507 = vmatpush1.bf16.msra.mxu0 %v2366
    %2508 = vmatprep.subr.bf16.mxu0 %v2373
    %2509 = vmatpush1.bf16.msra.mxu0 %v2372
    %2510 = vmatprep.subr.bf16.mxu0 %v2379
    %2511 = vmatpush1.bf16.msra.mxu0 %v2378
    %2512 = vmatprep.mubr.bf16.mxu0 %v1871
    %2513 = vmatmul.mubr.bf16.gmra.mrb[0].mxu0 %v1870
    %v2514 = vpop.f32.mrb[0].mxu0
    %v2515 = vadd.f32 %v1973, %v2514
    %v2516 = vpop.f32.mrb[0].mxu0
    %v2517 = vadd.f32 %v1977, %v2516
    %v2518 = vpop.f32.mrb[0].mxu0
    %v2519 = vpop.f32.mrb[0].mxu0
    %2520 = vdwg.mxu0
    %2521 = vmatprep.subr.bf16.mxu0 %v2291
    %2522 = vmatpush1.bf16.msra.mxu0 %v2290
    %2523 = vmatprep.subr.bf16.mxu0 %v2297
    %2524 = vmatpush1.bf16.msra.mxu0 %v2296
    %2525 = vmatprep.subr.bf16.mxu0 %v2303
    %2526 = vmatpush1.bf16.msra.mxu0 %v2302
    %2527 = vmatprep.subr.bf16.mxu0 %v2309
    %2528 = vmatpush1.bf16.msra.mxu0 %v2308
    %2529 = vmatprep.subr.bf16.mxu0 %v2315
    %2530 = vmatpush1.bf16.msra.mxu0 %v2314
    %2531 = vmatprep.subr.bf16.mxu0 %v2321
    %2532 = vmatpush1.bf16.msra.mxu0 %v2320
    %2533 = vmatprep.subr.bf16.mxu0 %v2327
    %2534 = vmatpush1.bf16.msra.mxu0 %v2326
    %2535 = vmatprep.subr.bf16.mxu0 %v2333
    %2536 = vmatpush1.bf16.msra.mxu0 %v2332
    %2537 = vmatprep.subr.bf16.mxu0 %v2339
    %2538 = vmatpush1.bf16.msra.mxu0 %v2338
    %2539 = vmatprep.subr.bf16.mxu0 %v2345
    %2540 = vmatpush1.bf16.msra.mxu0 %v2344
    %2541 = vmatprep.subr.bf16.mxu0 %v2351
    %2542 = vmatpush1.bf16.msra.mxu0 %v2350
    %2543 = vmatprep.subr.bf16.mxu0 %v2357
    %2544 = vmatpush1.bf16.msra.mxu0 %v2356
    %2545 = vmatprep.subr.bf16.mxu0 %v2363
    %2546 = vmatpush1.bf16.msra.mxu0 %v2362
    %2547 = vmatprep.subr.bf16.mxu0 %v2369
    %2548 = vmatpush1.bf16.msra.mxu0 %v2368
    %2549 = vmatprep.subr.bf16.mxu0 %v2375
    %2550 = vmatpush1.bf16.msra.mxu0 %v2374
    %2551 = vmatprep.subr.bf16.mxu0 %v2381
    %2552 = vmatpush1.bf16.msra.mxu0 %v2380
    %2553 = vmatprep.mubr.bf16.mxu0 %v1871
    %2554 = vmatmul.mubr.bf16.gmra.mrb[0].mxu0 %v1870
    %v2555 = vpop.f32.mrb[0].mxu0
    %v2556 = vadd.f32 %v1981, %v2555
    %v2557 = vpop.f32.mrb[0].mxu0
    %v2558 = vadd.f32 %v1985, %v2557
    %v2559 = vpop.f32.mrb[0].mxu0
    %v2560 = vpop.f32.mrb[0].mxu0
    %2561 = vdwg.mxu0
    %2562 = vmatprep.subr.bf16.mxu0 %v2293
    %2563 = vmatpush1.bf16.msra.mxu0 %v2292
    %2564 = vmatprep.subr.bf16.mxu0 %v2299
    %2565 = vmatpush1.bf16.msra.mxu0 %v2298
    %2566 = vmatprep.subr.bf16.mxu0 %v2305
    %2567 = vmatpush1.bf16.msra.mxu0 %v2304
    %2568 = vmatprep.subr.bf16.mxu0 %v2311
    %2569 = vmatpush1.bf16.msra.mxu0 %v2310
    %2570 = vmatprep.subr.bf16.mxu0 %v2317
    %2571 = vmatpush1.bf16.msra.mxu0 %v2316
    %2572 = vmatprep.subr.bf16.mxu0 %v2323
    %2573 = vmatpush1.bf16.msra.mxu0 %v2322
    %2574 = vmatprep.subr.bf16.mxu0 %v2329
    %2575 = vmatpush1.bf16.msra.mxu0 %v2328
    %2576 = vmatprep.subr.bf16.mxu0 %v2335
    %2577 = vmatpush1.bf16.msra.mxu0 %v2334
    %2578 = vmatprep.subr.bf16.mxu0 %v2341
    %2579 = vmatpush1.bf16.msra.mxu0 %v2340
    %2580 = vmatprep.subr.bf16.mxu0 %v2347
    %2581 = vmatpush1.bf16.msra.mxu0 %v2346
    %2582 = vmatprep.subr.bf16.mxu0 %v2353
    %2583 = vmatpush1.bf16.msra.mxu0 %v2352
    %2584 = vmatprep.subr.bf16.mxu0 %v2359
    %2585 = vmatpush1.bf16.msra.mxu0 %v2358
    %2586 = vmatprep.subr.bf16.mxu0 %v2365
    %2587 = vmatpush1.bf16.msra.mxu0 %v2364
    %2588 = vmatprep.subr.bf16.mxu0 %v2371
    %2589 = vmatpush1.bf16.msra.mxu0 %v2370
    %2590 = vmatprep.subr.bf16.mxu0 %v2377
    %2591 = vmatpush1.bf16.msra.mxu0 %v2376
    %2592 = vmatprep.subr.bf16.mxu0 %v2383
    %2593 = vmatpush1.bf16.msra.mxu0 %v2382
    %2594 = vmatprep.mubr.bf16.mxu0 %v1871
    %2595 = vmatmul.mubr.bf16.gmra.mrb[0].mxu0 %v1870
    %v2596 = vpop.f32.mrb[0].mxu0
    %v2597 = vadd.f32 %v1989, %v2596
    %v2598 = vpop.f32.mrb[0].mxu0
    %v2599 = vadd.f32 %v1993, %v2598
    %v2600 = vpop.f32.mrb[0].mxu0
    %v2601 = vpop.f32.mrb[0].mxu0
    %2602 = vdwg.mxu0
    %v2603 = vxor.u32 %v2515, 2147483648
    %v2604 = vxor.u32 %v2517, 2147483648
    %v2605 = vxor.u32 %v2556, 2147483648
    %v2606 = vxor.u32 %v2558, 2147483648
    %v2607 = vxor.u32 %v2597, 2147483648
    %v2608 = vxor.u32 %v2599, 2147483648
    %v2609 = vmul.f32 %v2603, 1.442695
    %v2610 = vpow.pop %v2609
    %v2611 = vmul.f32 %v2604, 1.442695
    %v2612 = vpow.pop %v2611
    %v2613 = vmul.f32 %v2605, 1.442695
    %v2614 = vpow.pop %v2613
    %v2615 = vmul.f32 %v2606, 1.442695
    %v2616 = vpow.pop %v2615
    %v2617 = vmul.f32 %v2607, 1.442695
    %v2618 = vpow.pop %v2617
    %v2619 = vmul.f32 %v2608, 1.442695
    %v2620 = vpow.pop %v2619
    %v2621 = vadd.f32 %v2610, 1.0
    %v2622 = vadd.f32 %v2612, 1.0
    %v2623 = vadd.f32 %v2614, 1.0
    %v2624 = vadd.f32 %v2616, 1.0
    %v2625 = vadd.f32 %v2618, 1.0
    %v2626 = vadd.f32 %v2620, 1.0
    %v2627 = vrcp.pop %v2621
    %v2628 = vmul.f32 1.0, %v2627
    %v2629 = vrcp.pop %v2622
    %v2630 = vmul.f32 1.0, %v2629
    %v2631 = vrcp.pop %v2623
    %v2632 = vmul.f32 1.0, %v2631
    %v2633 = vrcp.pop %v2624
    %v2634 = vmul.f32 1.0, %v2633
    %v2635 = vrcp.pop %v2625
    %v2636 = vmul.f32 1.0, %v2635
    %v2637 = vrcp.pop %v2626
    %v2638 = vmul.f32 1.0, %v2637
    %2639 = vst [vmem:[#allocation25] sm:$0xff] %v2628
    %2640 = vst [vmem:[#allocation25 + $0x8] sm:$0xff] %v2630
    %2641 = vst [vmem:[#allocation25 + $0x10] sm:$0xff] %v2632
    %2642 = vst [vmem:[#allocation25 + $0x18] sm:$0xff] %v2634
    %2643 = vst [vmem:[#allocation25 + $0x20] sm:$0xff] %v2636
    %2644 = vst [vmem:[#allocation25 + $0x28] sm:$0xff] %v2638
    %2645 = vst [vmem:[#allocation26] sm:$0xff] %v1449
    %2646 = vst [vmem:[#allocation26 + $0x8] sm:$0xff] %v1451
    // Predicated region
    $region114: #{lnn_vae_forward.1} parent=1 // pred_check
      _
    $region115: #{lnn_vae_forward.1} parent=1 // pred_check_branch
      %2648 = sbr.rel (0) target = $region117
    $region116: #{lnn_vae_forward.1} parent=1 // pred_region
      %s2650 = ssub.s32 768, 768
      %2651 = vsyncadd [#allocation4], %s2650
      %s2653 = sshll.u32 [#allocation25], 4
      %s2654 = int_to_ptr.vmem [resolvable:$true] %s2653
      %2656 = dma.vmem_to_hbm [thread:$0]  %s2654, 768, %s14, [#allocation4]
    $region117: #{lnn_vae_forward.1} parent=1 // pred_fallthru
      _
    // Predicated region
    $region118: #{lnn_vae_forward.1} parent=1 // pred_check
      _
    $region119: #{lnn_vae_forward.1} parent=1 // pred_check_branch
      %2658 = sbr.rel (0) target = $region121
    $region120: #{lnn_vae_forward.1} parent=1 // pred_region
      %s2660 = ssub.s32 256, 256
      %2661 = vsyncadd [#allocation27], %s2660
      %s2663 = sshll.u32 [#allocation26], 4
      %s2664 = int_to_ptr.vmem [resolvable:$true] %s2663
      %2666 = dma.vmem_to_hbm [thread:$0]  %s2664, 256, %s15, [#allocation27]
    $region121: #{lnn_vae_forward.1} parent=1 // pred_fallthru
      _
    // Predicated region
    $region122: #{lnn_vae_forward.1} parent=1 // pred_check
      _
    $region123: #{lnn_vae_forward.1} parent=1 // pred_check_branch
      %2668 = sbr.rel (0) target = $region125
    $region124: #{lnn_vae_forward.1} parent=1 // pred_region
      %2669 = dma.done [#allocation4], 768
    $region125: #{lnn_vae_forward.1} parent=1 // pred_fallthru
      _
    // Predicated region
    $region126: #{lnn_vae_forward.1} parent=1 // pred_check
      _
    $region127: #{lnn_vae_forward.1} parent=1 // pred_check_branch
      %2671 = sbr.rel (0) target = $region129
    $region128: #{lnn_vae_forward.1} parent=1 // pred_region
      %2672 = dma.done [#allocation27], 256
    $region129: #{lnn_vae_forward.1} parent=1 // pred_fallthru
      _
    %2673 = vsyncpa [#allocation3], 1
    %2674 = vsyncpa [#allocation6], 1
    %2675 = vsyncpa [#allocation9], 1
    %2676 = vsyncpa [#allocation12], 1
    %2677 = vsyncpa [#allocation15], 1
    %2678 = vsyncpa [#allocation18], 1
    %2679 = vsyncpa [#allocation21], 1
    %2680 = vsyncpa [#allocation24], 1
    %2681 = vsyncpa [#allocation4], 1
    %2682 = vsyncpa [#allocation27], 1

</llo_original>
